<compile_context>
chip_gen: v5e
topology: v5e:2x2
jax: 0.10.0
libtpu: 0.0.40
codegen_flags: <defaults>
</compile_context>

<pallas_src>
import functools

import jax
import jax.numpy as jnp
from jax.experimental import pallas as pl
from jax.experimental.pallas import tpu as pltpu

EPS = 1e-5


def _conv_rows(x_ref, w_ref, row0, th):
    """3x3/s1/p1 conv for `th` output rows as 9 accumulated MXU matmuls.

    x_ref: (H+2, W+2, Cin) spatially pre-padded bf16 image (channels = lane dim).
    w_ref: (9, Cin, Cpad) bf16 filter taps.
    Returns (th*W, Cpad) f32 conv output for output rows [row0, row0 + th).
    """
    _, Wp, Cin = x_ref.shape
    W = Wp - 2
    Cpad = w_ref.shape[-1]
    # Halo'd window of padded-input rows needed for these output rows.
    xw = x_ref[pl.ds(row0, th + 2), :, :]                      # (th+2, W+2, Cin)
    acc = jnp.zeros((th * W, Cpad), jnp.float32)
    for ki in range(3):
        for kj in range(3):
            tap = xw[ki:ki + th, kj:kj + W, :].reshape(th * W, Cin)   # bf16
            acc = acc + jnp.dot(tap, w_ref[ki * 3 + kj],
                                preferred_element_type=jnp.float32)
    return acc


def _stats_kernel(x_ref, w_ref, stats_ref, *, th):
    row0 = pl.multiple_of(pl.program_id(1) * th, th)
    y = _conv_rows(x_ref, w_ref, row0, th)
    stats_ref[0:1, :] = jnp.sum(y, axis=0, keepdims=True)          # partial sum
    stats_ref[1:2, :] = jnp.sum(y * y, axis=0, keepdims=True)      # partial sumsq


def _norm_kernel(x_ref, w_ref, bn_ref, o_ref, *, th):
    row0 = pl.multiple_of(pl.program_id(1) * th, th)
    y = _conv_rows(x_ref, w_ref, row0, th)
    y = (y - bn_ref[0:1, :]) * bn_ref[1:2, :]                      # (x - mean) * inv_std
    o_ref[...] = jnp.maximum(y, 0.0).astype(o_ref.dtype)           # ReLU


def basic_conv_block(x_nchw, weight_oihw, *, row_block=8):
    """Forward pass of BasicConvBlock. x: (N, Cin, H, W), weight: (Cout, Cin, 3, 3)."""
    N, Cin, H, W = x_nchw.shape
    Cout, Cin_w, KH, KW = weight_oihw.shape
    assert Cin == Cin_w and KH == 3 and KW == 3

    th = min(row_block, H)
    while H % th:                       # pick a row-tile that divides H
        th -= 1
    nhb = H // th
    Cpad = ((Cout + 127) // 128) * 128  # lane-dense output channels

    # NCHW -> NHWC (Cin in the lane/contraction dim), spatial zero pad, bf16 operands.
    x_nhwc = jnp.transpose(x_nchw, (0, 2, 3, 1))
    x_pad = jnp.pad(x_nhwc, ((0, 0), (1, 1), (1, 1), (0, 0))).astype(jnp.bfloat16)
    Hp, Wp = H + 2, W + 2

    # OIHW -> (KH*KW, Cin, Cpad); zero-pad the output channels (pads normalize to 0).
    w = jnp.transpose(weight_oihw, (2, 3, 1, 0)).reshape(KH * KW, Cin, Cout)
    w = jnp.pad(w, ((0, 0), (0, 0), (0, Cpad - Cout))).astype(jnp.bfloat16)

    M = N * H * W
    conv_flops = 2 * M * (KH * KW * Cin) * Cpad
    x_bytes = N * Hp * Wp * Cin * 2
    w_bytes = KH * KW * Cin * Cpad * 2

    grid = (N, nhb)
    x_spec = pl.BlockSpec((None, Hp, Wp, Cin), lambda n, h: (n, 0, 0, 0))
    w_spec = pl.BlockSpec((KH * KW, Cin, Cpad), lambda n, h: (0, 0, 0))
    cparams = pltpu.CompilerParams(
        dimension_semantics=("parallel", "parallel"),
        vmem_limit_bytes=32 * 1024 * 1024,
    )

    # ---- pass 1: conv + per-tile partial channel sums / sums of squares ----
    stats = pl.pallas_call(
        functools.partial(_stats_kernel, th=th),
        out_shape=jax.ShapeDtypeStruct((N, nhb, 2, Cpad), jnp.float32),
        grid=grid,
        in_specs=[x_spec, w_spec],
        out_specs=pl.BlockSpec((None, None, 2, Cpad), lambda n, h: (n, h, 0, 0)),
        compiler_params=cparams,
        cost_estimate=pl.CostEstimate(
            flops=conv_flops, transcendentals=0,
            bytes_accessed=x_bytes + w_bytes + N * nhb * 2 * Cpad * 4),
    )(x_pad, w)

    # ---- global batch statistics over all N*H*W rows (f32, tiny XLA glue) ----
    s1 = jnp.sum(stats[:, :, 0, :], axis=(0, 1))
    s2 = jnp.sum(stats[:, :, 1, :], axis=(0, 1))
    mean = s1 / M
    var = jnp.maximum(s2 / M - mean * mean, 0.0)   # biased var, clamped for safety
    inv_std = jax.lax.rsqrt(var + EPS)
    bn = jnp.stack([mean, inv_std], axis=0)        # (2, Cpad) f32
    # TODO(synk): PyTorch BatchNorm2d(training) also updates running_mean /
    # running_var; only the forward normalization is implemented here.

    # ---- pass 2: recompute conv, normalize + ReLU, lane-dense padded output ----
    out_flat = pl.pallas_call(
        functools.partial(_norm_kernel, th=th),
        out_shape=jax.ShapeDtypeStruct((N, H * W, Cpad), jnp.float32),
        grid=grid,
        in_specs=[x_spec, w_spec, pl.BlockSpec((2, Cpad), lambda n, h: (0, 0))],
        out_specs=pl.BlockSpec((None, th * W, Cpad), lambda n, h: (n, h, 0)),
        compiler_params=cparams,
        cost_estimate=pl.CostEstimate(
            flops=conv_flops, transcendentals=0,
            bytes_accessed=x_bytes + w_bytes + 2 * Cpad * 4 + M * Cpad * 4),
    )(x_pad, w, bn)

    out = out_flat.reshape(N, H, W, Cpad)[:, :, :, :Cout]
    return jnp.transpose(out, (0, 3, 1, 2))        # back to NCHW


def _reference(x_nchw, weight_oihw):
    # Same math as the PyTorch module (conv -> train-mode BN(affine=False) -> ReLU).
    # Conv operands are quantized to bf16 exactly like the kernel's MXU inputs
    # (accumulation is f32 in both), so the comparison isolates kernel logic.
    xb = x_nchw.astype(jnp.bfloat16).astype(jnp.float32)
    wb = weight_oihw.astype(jnp.bfloat16).astype(jnp.float32)
    y = jax.lax.conv_general_dilated(
        xb, wb, window_strides=(1, 1), padding=((1, 1), (1, 1)),
        dimension_numbers=("NCHW", "OIHW", "NCHW"))
    mean = jnp.mean(y, axis=(0, 2, 3), keepdims=True)
    var = jnp.mean((y - mean) ** 2, axis=(0, 2, 3), keepdims=True)
    return jnp.maximum((y - mean) * jax.lax.rsqrt(var + EPS), 0.0)


if __name__ == "__main__":
    key = jax.random.PRNGKey(0)
    kx, kw = jax.random.split(key)

    N, Cin, H, W = 2, 4, 16, 16
    Cout = 8

    x = jax.random.normal(kx, (N, Cin, H, W), dtype=jnp.float32)
    weight = jax.random.normal(kw, (Cout, Cin, 3, 3), dtype=jnp.float32) * 0.1

    fwd = jax.jit(basic_conv_block)
    out = jax.block_until_ready(fwd(x, weight))

    assert out.shape == (N, Cout, H, W)
    ref = jax.block_until_ready(_reference(x, weight))
    err = float(jnp.max(jnp.abs(out - ref)))
    assert err < 1e-2, f"mismatch vs reference: {err}"

    print("KERNEL_OK")
</pallas_src>

<mosaic_0001>
module attributes {stable_mosaic.version = 11 : i64} {
  func.func @_stats_kernel(%arg0: i32, %arg1: i32, %arg2: memref<1x18x18x4xbf16, #tpu.memory_space<vmem>>, %arg3: memref<9x4x128xbf16, #tpu.memory_space<vmem>>, %arg4: memref<1x1x2x128xf32, #tpu.memory_space<vmem>>) attributes {dimension_semantics = [#tpu.dimension_semantics<parallel>, #tpu.dimension_semantics<parallel>], iteration_bounds = array<i64: 2, 2>, scalar_prefetch = 0 : i64, scratch_operands = 0 : i64, tpu.core_type = #tpu.core_type<tc>, window_params = [{transform_indices = @transform_0, window_bounds = array<i64: 1, 18, 18, 4>}, {pipeline_mode = #tpu.pipeline_mode<synchronous>, transform_indices = @transform_1, window_bounds = array<i64: 9, 4, 128>}, {transform_indices = @transform_2, window_bounds = array<i64: 1, 1, 2, 128>}]} {
    %c8_i32 = arith.constant 8 : i32
    %0 = arith.muli %arg1, %c8_i32 : i32
    %1 = tpu.assume_multiple %0, 8 : i32
    %c0 = arith.constant 0 : index
    %2 = arith.index_cast %1 : i32 to index
    %c0_0 = arith.constant 0 : index
    %c0_1 = arith.constant 0 : index
    %3 = vector.load %arg2[%c0, %2, %c0_0, %c0_1] : memref<1x18x18x4xbf16, #tpu.memory_space<vmem>>, vector<1x10x18x4xbf16>
    %4 = vector.shape_cast %3 : vector<1x10x18x4xbf16> to vector<10x18x4xbf16>
    %cst = arith.constant 0.000000e+00 : f32
    %5 = vector.broadcast %cst : f32 to vector<128x128xf32>
    %6 = vector.extract_strided_slice %4 {offsets = [0, 0, 0], sizes = [8, 16, 4], strides = [1, 1, 1]} : vector<10x18x4xbf16> to vector<8x16x4xbf16>
    %7 = vector.shape_cast %6 : vector<8x16x4xbf16> to vector<128x4xbf16>
    %c0_2 = arith.constant 0 : index
    %c0_3 = arith.constant 0 : index
    %c0_4 = arith.constant 0 : index
    %8 = vector.load %arg3[%c0_2, %c0_3, %c0_4] : memref<9x4x128xbf16, #tpu.memory_space<vmem>>, vector<1x4x128xbf16>
    %9 = vector.shape_cast %8 : vector<1x4x128xbf16> to vector<4x128xbf16>
    %cst_5 = arith.constant dense<0.000000e+00> : vector<128x128xf32>
    %10 = tpu.matmul %7, %9, %cst_5 {dimension_numbers = #tpu.dot_dimension_numbers<[1], [0], [0], [1], [0, 0, 1, 1], [], []>} : vector<128x4xbf16>, vector<4x128xbf16>, vector<128x128xf32> -> vector<128x128xf32>
    %11 = arith.addf %5, %10 : vector<128x128xf32>
    %12 = vector.extract_strided_slice %4 {offsets = [0, 1, 0], sizes = [8, 16, 4], strides = [1, 1, 1]} : vector<10x18x4xbf16> to vector<8x16x4xbf16>
    %13 = vector.shape_cast %12 : vector<8x16x4xbf16> to vector<128x4xbf16>
    %c1 = arith.constant 1 : index
    %c0_6 = arith.constant 0 : index
    %c0_7 = arith.constant 0 : index
    %14 = vector.load %arg3[%c1, %c0_6, %c0_7] : memref<9x4x128xbf16, #tpu.memory_space<vmem>>, vector<1x4x128xbf16>
    %15 = vector.shape_cast %14 : vector<1x4x128xbf16> to vector<4x128xbf16>
    %cst_8 = arith.constant dense<0.000000e+00> : vector<128x128xf32>
    %16 = tpu.matmul %13, %15, %cst_8 {dimension_numbers = #tpu.dot_dimension_numbers<[1], [0], [0], [1], [0, 0, 1, 1], [], []>} : vector<128x4xbf16>, vector<4x128xbf16>, vector<128x128xf32> -> vector<128x128xf32>
    %17 = arith.addf %11, %16 : vector<128x128xf32>
    %18 = vector.extract_strided_slice %4 {offsets = [0, 2, 0], sizes = [8, 16, 4], strides = [1, 1, 1]} : vector<10x18x4xbf16> to vector<8x16x4xbf16>
    %19 = vector.shape_cast %18 : vector<8x16x4xbf16> to vector<128x4xbf16>
    %c2 = arith.constant 2 : index
    %c0_9 = arith.constant 0 : index
    %c0_10 = arith.constant 0 : index
    %20 = vector.load %arg3[%c2, %c0_9, %c0_10] : memref<9x4x128xbf16, #tpu.memory_space<vmem>>, vector<1x4x128xbf16>
    %21 = vector.shape_cast %20 : vector<1x4x128xbf16> to vector<4x128xbf16>
    %cst_11 = arith.constant dense<0.000000e+00> : vector<128x128xf32>
    %22 = tpu.matmul %19, %21, %cst_11 {dimension_numbers = #tpu.dot_dimension_numbers<[1], [0], [0], [1], [0, 0, 1, 1], [], []>} : vector<128x4xbf16>, vector<4x128xbf16>, vector<128x128xf32> -> vector<128x128xf32>
    %23 = arith.addf %17, %22 : vector<128x128xf32>
    %24 = vector.extract_strided_slice %4 {offsets = [1, 0, 0], sizes = [8, 16, 4], strides = [1, 1, 1]} : vector<10x18x4xbf16> to vector<8x16x4xbf16>
    %25 = vector.shape_cast %24 : vector<8x16x4xbf16> to vector<128x4xbf16>
    %c3 = arith.constant 3 : index
    %c0_12 = arith.constant 0 : index
    %c0_13 = arith.constant 0 : index
    %26 = vector.load %arg3[%c3, %c0_12, %c0_13] : memref<9x4x128xbf16, #tpu.memory_space<vmem>>, vector<1x4x128xbf16>
    %27 = vector.shape_cast %26 : vector<1x4x128xbf16> to vector<4x128xbf16>
    %cst_14 = arith.constant dense<0.000000e+00> : vector<128x128xf32>
    %28 = tpu.matmul %25, %27, %cst_14 {dimension_numbers = #tpu.dot_dimension_numbers<[1], [0], [0], [1], [0, 0, 1, 1], [], []>} : vector<128x4xbf16>, vector<4x128xbf16>, vector<128x128xf32> -> vector<128x128xf32>
    %29 = arith.addf %23, %28 : vector<128x128xf32>
    %30 = vector.extract_strided_slice %4 {offsets = [1, 1, 0], sizes = [8, 16, 4], strides = [1, 1, 1]} : vector<10x18x4xbf16> to vector<8x16x4xbf16>
    %31 = vector.shape_cast %30 : vector<8x16x4xbf16> to vector<128x4xbf16>
    %c4 = arith.constant 4 : index
    %c0_15 = arith.constant 0 : index
    %c0_16 = arith.constant 0 : index
    %32 = vector.load %arg3[%c4, %c0_15, %c0_16] : memref<9x4x128xbf16, #tpu.memory_space<vmem>>, vector<1x4x128xbf16>
    %33 = vector.shape_cast %32 : vector<1x4x128xbf16> to vector<4x128xbf16>
    %cst_17 = arith.constant dense<0.000000e+00> : vector<128x128xf32>
    %34 = tpu.matmul %31, %33, %cst_17 {dimension_numbers = #tpu.dot_dimension_numbers<[1], [0], [0], [1], [0, 0, 1, 1], [], []>} : vector<128x4xbf16>, vector<4x128xbf16>, vector<128x128xf32> -> vector<128x128xf32>
    %35 = arith.addf %29, %34 : vector<128x128xf32>
    %36 = vector.extract_strided_slice %4 {offsets = [1, 2, 0], sizes = [8, 16, 4], strides = [1, 1, 1]} : vector<10x18x4xbf16> to vector<8x16x4xbf16>
    %37 = vector.shape_cast %36 : vector<8x16x4xbf16> to vector<128x4xbf16>
    %c5 = arith.constant 5 : index
    %c0_18 = arith.constant 0 : index
    %c0_19 = arith.constant 0 : index
    %38 = vector.load %arg3[%c5, %c0_18, %c0_19] : memref<9x4x128xbf16, #tpu.memory_space<vmem>>, vector<1x4x128xbf16>
    %39 = vector.shape_cast %38 : vector<1x4x128xbf16> to vector<4x128xbf16>
    %cst_20 = arith.constant dense<0.000000e+00> : vector<128x128xf32>
    %40 = tpu.matmul %37, %39, %cst_20 {dimension_numbers = #tpu.dot_dimension_numbers<[1], [0], [0], [1], [0, 0, 1, 1], [], []>} : vector<128x4xbf16>, vector<4x128xbf16>, vector<128x128xf32> -> vector<128x128xf32>
    %41 = arith.addf %35, %40 : vector<128x128xf32>
    %42 = vector.extract_strided_slice %4 {offsets = [2, 0, 0], sizes = [8, 16, 4], strides = [1, 1, 1]} : vector<10x18x4xbf16> to vector<8x16x4xbf16>
    %43 = vector.shape_cast %42 : vector<8x16x4xbf16> to vector<128x4xbf16>
    %c6 = arith.constant 6 : index
    %c0_21 = arith.constant 0 : index
    %c0_22 = arith.constant 0 : index
    %44 = vector.load %arg3[%c6, %c0_21, %c0_22] : memref<9x4x128xbf16, #tpu.memory_space<vmem>>, vector<1x4x128xbf16>
    %45 = vector.shape_cast %44 : vector<1x4x128xbf16> to vector<4x128xbf16>
    %cst_23 = arith.constant dense<0.000000e+00> : vector<128x128xf32>
    %46 = tpu.matmul %43, %45, %cst_23 {dimension_numbers = #tpu.dot_dimension_numbers<[1], [0], [0], [1], [0, 0, 1, 1], [], []>} : vector<128x4xbf16>, vector<4x128xbf16>, vector<128x128xf32> -> vector<128x128xf32>
    %47 = arith.addf %41, %46 : vector<128x128xf32>
    %48 = vector.extract_strided_slice %4 {offsets = [2, 1, 0], sizes = [8, 16, 4], strides = [1, 1, 1]} : vector<10x18x4xbf16> to vector<8x16x4xbf16>
    %49 = vector.shape_cast %48 : vector<8x16x4xbf16> to vector<128x4xbf16>
    %c7 = arith.constant 7 : index
    %c0_24 = arith.constant 0 : index
    %c0_25 = arith.constant 0 : index
    %50 = vector.load %arg3[%c7, %c0_24, %c0_25] : memref<9x4x128xbf16, #tpu.memory_space<vmem>>, vector<1x4x128xbf16>
    %51 = vector.shape_cast %50 : vector<1x4x128xbf16> to vector<4x128xbf16>
    %cst_26 = arith.constant dense<0.000000e+00> : vector<128x128xf32>
    %52 = tpu.matmul %49, %51, %cst_26 {dimension_numbers = #tpu.dot_dimension_numbers<[1], [0], [0], [1], [0, 0, 1, 1], [], []>} : vector<128x4xbf16>, vector<4x128xbf16>, vector<128x128xf32> -> vector<128x128xf32>
    %53 = arith.addf %47, %52 : vector<128x128xf32>
    %54 = vector.extract_strided_slice %4 {offsets = [2, 2, 0], sizes = [8, 16, 4], strides = [1, 1, 1]} : vector<10x18x4xbf16> to vector<8x16x4xbf16>
    %55 = vector.shape_cast %54 : vector<8x16x4xbf16> to vector<128x4xbf16>
    %c8 = arith.constant 8 : index
    %c0_27 = arith.constant 0 : index
    %c0_28 = arith.constant 0 : index
    %56 = vector.load %arg3[%c8, %c0_27, %c0_28] : memref<9x4x128xbf16, #tpu.memory_space<vmem>>, vector<1x4x128xbf16>
    %57 = vector.shape_cast %56 : vector<1x4x128xbf16> to vector<4x128xbf16>
    %cst_29 = arith.constant dense<0.000000e+00> : vector<128x128xf32>
    %58 = tpu.matmul %55, %57, %cst_29 {dimension_numbers = #tpu.dot_dimension_numbers<[1], [0], [0], [1], [0, 0, 1, 1], [], []>} : vector<128x4xbf16>, vector<4x128xbf16>, vector<128x128xf32> -> vector<128x128xf32>
    %59 = arith.addf %53, %58 : vector<128x128xf32>
    %cst_30 = arith.constant dense<0.000000e+00> : vector<128xf32>
    %60 = vector.multi_reduction <add>, %59, %cst_30 [0] : vector<128x128xf32> to vector<128xf32>
    %61 = vector.shape_cast %60 : vector<128xf32> to vector<1x128xf32>
    %c0_31 = arith.constant 0 : index
    %c0_32 = arith.constant 0 : index
    %c0_33 = arith.constant 0 : index
    %c0_34 = arith.constant 0 : index
    %62 = vector.load %arg4[%c0_31, %c0_32, %c0_33, %c0_34] : memref<1x1x2x128xf32, #tpu.memory_space<vmem>>, vector<1x1x1x128xf32>
    %63 = vector.shape_cast %62 : vector<1x1x1x128xf32> to vector<1x128xf32>
    %64 = vector.shape_cast %61 : vector<1x128xf32> to vector<1x1x1x128xf32>
    tpu.vector_store %arg4[%c0_31, %c0_32, %c0_33, %c0_34], %64 {strides = array<i32>} : memref<1x1x2x128xf32, #tpu.memory_space<vmem>>, vector<1x1x1x128xf32>,
    %65 = arith.mulf %59, %59 : vector<128x128xf32>
    %cst_35 = arith.constant dense<0.000000e+00> : vector<128xf32>
    %66 = vector.multi_reduction <add>, %65, %cst_35 [0] : vector<128x128xf32> to vector<128xf32>
    %67 = vector.shape_cast %66 : vector<128xf32> to vector<1x128xf32>
    %c0_36 = arith.constant 0 : index
    %c0_37 = arith.constant 0 : index
    %c1_38 = arith.constant 1 : index
    %c0_39 = arith.constant 0 : index
    %68 = vector.load %arg4[%c0_36, %c0_37, %c1_38, %c0_39] : memref<1x1x2x128xf32, #tpu.memory_space<vmem>>, vector<1x1x1x128xf32>
    %69 = vector.shape_cast %68 : vector<1x1x1x128xf32> to vector<1x128xf32>
    %70 = vector.shape_cast %67 : vector<1x128xf32> to vector<1x1x1x128xf32>
    tpu.vector_store %arg4[%c0_36, %c0_37, %c1_38, %c0_39], %70 {strides = array<i32>} : memref<1x1x2x128xf32, #tpu.memory_space<vmem>>, vector<1x1x1x128xf32>,
    return
  }
  func.func @transform_0(%arg0: i32, %arg1: i32) -> (i32, i32, i32, i32) {
    %c0_i32 = arith.constant 0 : i32
    %c0_i32_0 = arith.constant 0 : i32
    %c0_i32_1 = arith.constant 0 : i32
    %c0_i32_2 = arith.constant 0 : i32
    return %arg0, %c0_i32, %c0_i32_0, %c0_i32_1 : i32, i32, i32, i32
  }
  func.func @transform_1(%arg0: i32, %arg1: i32) -> (i32, i32, i32) {
    %c0_i32 = arith.constant 0 : i32
    %c0_i32_0 = arith.constant 0 : i32
    %c0_i32_1 = arith.constant 0 : i32
    %c0_i32_2 = arith.constant 0 : i32
    return %c0_i32, %c0_i32_0, %c0_i32_1 : i32, i32, i32
  }
  func.func @transform_2(%arg0: i32, %arg1: i32) -> (i32, i32, i32, i32) {
    %c0_i32 = arith.constant 0 : i32
    %c0_i32_0 = arith.constant 0 : i32
    %c0_i32_1 = arith.constant 0 : i32
    return %arg0, %arg1, %c0_i32, %c0_i32_0 : i32, i32, i32, i32
  }
}

module attributes {stable_mosaic.version = 11 : i64} {
  func.func @_norm_kernel(%arg0: i32, %arg1: i32, %arg2: memref<1x18x18x4xbf16, #tpu.memory_space<vmem>>, %arg3: memref<9x4x128xbf16, #tpu.memory_space<vmem>>, %arg4: memref<2x128xf32, #tpu.memory_space<vmem>>, %arg5: memref<1x128x128xf32, #tpu.memory_space<vmem>>) attributes {dimension_semantics = [#tpu.dimension_semantics<parallel>, #tpu.dimension_semantics<parallel>], iteration_bounds = array<i64: 2, 2>, scalar_prefetch = 0 : i64, scratch_operands = 0 : i64, tpu.core_type = #tpu.core_type<tc>, window_params = [{transform_indices = @transform_0, window_bounds = array<i64: 1, 18, 18, 4>}, {pipeline_mode = #tpu.pipeline_mode<synchronous>, transform_indices = @transform_1, window_bounds = array<i64: 9, 4, 128>}, {pipeline_mode = #tpu.pipeline_mode<synchronous>, transform_indices = @transform_2, window_bounds = array<i64: 2, 128>}, {transform_indices = @transform_3, window_bounds = array<i64: 1, 128, 128>}]} {
    %c8_i32 = arith.constant 8 : i32
    %0 = arith.muli %arg1, %c8_i32 : i32
    %1 = tpu.assume_multiple %0, 8 : i32
    %c0 = arith.constant 0 : index
    %2 = arith.index_cast %1 : i32 to index
    %c0_0 = arith.constant 0 : index
    %c0_1 = arith.constant 0 : index
    %3 = vector.load %arg2[%c0, %2, %c0_0, %c0_1] : memref<1x18x18x4xbf16, #tpu.memory_space<vmem>>, vector<1x10x18x4xbf16>
    %4 = vector.shape_cast %3 : vector<1x10x18x4xbf16> to vector<10x18x4xbf16>
    %cst = arith.constant 0.000000e+00 : f32
    %5 = vector.broadcast %cst : f32 to vector<128x128xf32>
    %6 = vector.extract_strided_slice %4 {offsets = [0, 0, 0], sizes = [8, 16, 4], strides = [1, 1, 1]} : vector<10x18x4xbf16> to vector<8x16x4xbf16>
    %7 = vector.shape_cast %6 : vector<8x16x4xbf16> to vector<128x4xbf16>
    %c0_2 = arith.constant 0 : index
    %c0_3 = arith.constant 0 : index
    %c0_4 = arith.constant 0 : index
    %8 = vector.load %arg3[%c0_2, %c0_3, %c0_4] : memref<9x4x128xbf16, #tpu.memory_space<vmem>>, vector<1x4x128xbf16>
    %9 = vector.shape_cast %8 : vector<1x4x128xbf16> to vector<4x128xbf16>
    %cst_5 = arith.constant dense<0.000000e+00> : vector<128x128xf32>
    %10 = tpu.matmul %7, %9, %cst_5 {dimension_numbers = #tpu.dot_dimension_numbers<[1], [0], [0], [1], [0, 0, 1, 1], [], []>} : vector<128x4xbf16>, vector<4x128xbf16>, vector<128x128xf32> -> vector<128x128xf32>
    %11 = arith.addf %5, %10 : vector<128x128xf32>
    %12 = vector.extract_strided_slice %4 {offsets = [0, 1, 0], sizes = [8, 16, 4], strides = [1, 1, 1]} : vector<10x18x4xbf16> to vector<8x16x4xbf16>
    %13 = vector.shape_cast %12 : vector<8x16x4xbf16> to vector<128x4xbf16>
    %c1 = arith.constant 1 : index
    %c0_6 = arith.constant 0 : index
    %c0_7 = arith.constant 0 : index
    %14 = vector.load %arg3[%c1, %c0_6, %c0_7] : memref<9x4x128xbf16, #tpu.memory_space<vmem>>, vector<1x4x128xbf16>
    %15 = vector.shape_cast %14 : vector<1x4x128xbf16> to vector<4x128xbf16>
    %cst_8 = arith.constant dense<0.000000e+00> : vector<128x128xf32>
    %16 = tpu.matmul %13, %15, %cst_8 {dimension_numbers = #tpu.dot_dimension_numbers<[1], [0], [0], [1], [0, 0, 1, 1], [], []>} : vector<128x4xbf16>, vector<4x128xbf16>, vector<128x128xf32> -> vector<128x128xf32>
    %17 = arith.addf %11, %16 : vector<128x128xf32>
    %18 = vector.extract_strided_slice %4 {offsets = [0, 2, 0], sizes = [8, 16, 4], strides = [1, 1, 1]} : vector<10x18x4xbf16> to vector<8x16x4xbf16>
    %19 = vector.shape_cast %18 : vector<8x16x4xbf16> to vector<128x4xbf16>
    %c2 = arith.constant 2 : index
    %c0_9 = arith.constant 0 : index
    %c0_10 = arith.constant 0 : index
    %20 = vector.load %arg3[%c2, %c0_9, %c0_10] : memref<9x4x128xbf16, #tpu.memory_space<vmem>>, vector<1x4x128xbf16>
    %21 = vector.shape_cast %20 : vector<1x4x128xbf16> to vector<4x128xbf16>
    %cst_11 = arith.constant dense<0.000000e+00> : vector<128x128xf32>
    %22 = tpu.matmul %19, %21, %cst_11 {dimension_numbers = #tpu.dot_dimension_numbers<[1], [0], [0], [1], [0, 0, 1, 1], [], []>} : vector<128x4xbf16>, vector<4x128xbf16>, vector<128x128xf32> -> vector<128x128xf32>
    %23 = arith.addf %17, %22 : vector<128x128xf32>
    %24 = vector.extract_strided_slice %4 {offsets = [1, 0, 0], sizes = [8, 16, 4], strides = [1, 1, 1]} : vector<10x18x4xbf16> to vector<8x16x4xbf16>
    %25 = vector.shape_cast %24 : vector<8x16x4xbf16> to vector<128x4xbf16>
    %c3 = arith.constant 3 : index
    %c0_12 = arith.constant 0 : index
    %c0_13 = arith.constant 0 : index
    %26 = vector.load %arg3[%c3, %c0_12, %c0_13] : memref<9x4x128xbf16, #tpu.memory_space<vmem>>, vector<1x4x128xbf16>
    %27 = vector.shape_cast %26 : vector<1x4x128xbf16> to vector<4x128xbf16>
    %cst_14 = arith.constant dense<0.000000e+00> : vector<128x128xf32>
    %28 = tpu.matmul %25, %27, %cst_14 {dimension_numbers = #tpu.dot_dimension_numbers<[1], [0], [0], [1], [0, 0, 1, 1], [], []>} : vector<128x4xbf16>, vector<4x128xbf16>, vector<128x128xf32> -> vector<128x128xf32>
    %29 = arith.addf %23, %28 : vector<128x128xf32>
    %30 = vector.extract_strided_slice %4 {offsets = [1, 1, 0], sizes = [8, 16, 4], strides = [1, 1, 1]} : vector<10x18x4xbf16> to vector<8x16x4xbf16>
    %31 = vector.shape_cast %30 : vector<8x16x4xbf16> to vector<128x4xbf16>
    %c4 = arith.constant 4 : index
    %c0_15 = arith.constant 0 : index
    %c0_16 = arith.constant 0 : index
    %32 = vector.load %arg3[%c4, %c0_15, %c0_16] : memref<9x4x128xbf16, #tpu.memory_space<vmem>>, vector<1x4x128xbf16>
    %33 = vector.shape_cast %32 : vector<1x4x128xbf16> to vector<4x128xbf16>
    %cst_17 = arith.constant dense<0.000000e+00> : vector<128x128xf32>
    %34 = tpu.matmul %31, %33, %cst_17 {dimension_numbers = #tpu.dot_dimension_numbers<[1], [0], [0], [1], [0, 0, 1, 1], [], []>} : vector<128x4xbf16>, vector<4x128xbf16>, vector<128x128xf32> -> vector<128x128xf32>
    %35 = arith.addf %29, %34 : vector<128x128xf32>
    %36 = vector.extract_strided_slice %4 {offsets = [1, 2, 0], sizes = [8, 16, 4], strides = [1, 1, 1]} : vector<10x18x4xbf16> to vector<8x16x4xbf16>
    %37 = vector.shape_cast %36 : vector<8x16x4xbf16> to vector<128x4xbf16>
    %c5 = arith.constant 5 : index
    %c0_18 = arith.constant 0 : index
    %c0_19 = arith.constant 0 : index
    %38 = vector.load %arg3[%c5, %c0_18, %c0_19] : memref<9x4x128xbf16, #tpu.memory_space<vmem>>, vector<1x4x128xbf16>
    %39 = vector.shape_cast %38 : vector<1x4x128xbf16> to vector<4x128xbf16>
    %cst_20 = arith.constant dense<0.000000e+00> : vector<128x128xf32>
    %40 = tpu.matmul %37, %39, %cst_20 {dimension_numbers = #tpu.dot_dimension_numbers<[1], [0], [0], [1], [0, 0, 1, 1], [], []>} : vector<128x4xbf16>, vector<4x128xbf16>, vector<128x128xf32> -> vector<128x128xf32>
    %41 = arith.addf %35, %40 : vector<128x128xf32>
    %42 = vector.extract_strided_slice %4 {offsets = [2, 0, 0], sizes = [8, 16, 4], strides = [1, 1, 1]} : vector<10x18x4xbf16> to vector<8x16x4xbf16>
    %43 = vector.shape_cast %42 : vector<8x16x4xbf16> to vector<128x4xbf16>
    %c6 = arith.constant 6 : index
    %c0_21 = arith.constant 0 : index
    %c0_22 = arith.constant 0 : index
    %44 = vector.load %arg3[%c6, %c0_21, %c0_22] : memref<9x4x128xbf16, #tpu.memory_space<vmem>>, vector<1x4x128xbf16>
    %45 = vector.shape_cast %44 : vector<1x4x128xbf16> to vector<4x128xbf16>
    %cst_23 = arith.constant dense<0.000000e+00> : vector<128x128xf32>
    %46 = tpu.matmul %43, %45, %cst_23 {dimension_numbers = #tpu.dot_dimension_numbers<[1], [0], [0], [1], [0, 0, 1, 1], [], []>} : vector<128x4xbf16>, vector<4x128xbf16>, vector<128x128xf32> -> vector<128x128xf32>
    %47 = arith.addf %41, %46 : vector<128x128xf32>
    %48 = vector.extract_strided_slice %4 {offsets = [2, 1, 0], sizes = [8, 16, 4], strides = [1, 1, 1]} : vector<10x18x4xbf16> to vector<8x16x4xbf16>
    %49 = vector.shape_cast %48 : vector<8x16x4xbf16> to vector<128x4xbf16>
    %c7 = arith.constant 7 : index
    %c0_24 = arith.constant 0 : index
    %c0_25 = arith.constant 0 : index
    %50 = vector.load %arg3[%c7, %c0_24, %c0_25] : memref<9x4x128xbf16, #tpu.memory_space<vmem>>, vector<1x4x128xbf16>
    %51 = vector.shape_cast %50 : vector<1x4x128xbf16> to vector<4x128xbf16>
    %cst_26 = arith.constant dense<0.000000e+00> : vector<128x128xf32>
    %52 = tpu.matmul %49, %51, %cst_26 {dimension_numbers = #tpu.dot_dimension_numbers<[1], [0], [0], [1], [0, 0, 1, 1], [], []>} : vector<128x4xbf16>, vector<4x128xbf16>, vector<128x128xf32> -> vector<128x128xf32>
    %53 = arith.addf %47, %52 : vector<128x128xf32>
    %54 = vector.extract_strided_slice %4 {offsets = [2, 2, 0], sizes = [8, 16, 4], strides = [1, 1, 1]} : vector<10x18x4xbf16> to vector<8x16x4xbf16>
    %55 = vector.shape_cast %54 : vector<8x16x4xbf16> to vector<128x4xbf16>
    %c8 = arith.constant 8 : index
    %c0_27 = arith.constant 0 : index
    %c0_28 = arith.constant 0 : index
    %56 = vector.load %arg3[%c8, %c0_27, %c0_28] : memref<9x4x128xbf16, #tpu.memory_space<vmem>>, vector<1x4x128xbf16>
    %57 = vector.shape_cast %56 : vector<1x4x128xbf16> to vector<4x128xbf16>
    %cst_29 = arith.constant dense<0.000000e+00> : vector<128x128xf32>
    %58 = tpu.matmul %55, %57, %cst_29 {dimension_numbers = #tpu.dot_dimension_numbers<[1], [0], [0], [1], [0, 0, 1, 1], [], []>} : vector<128x4xbf16>, vector<4x128xbf16>, vector<128x128xf32> -> vector<128x128xf32>
    %59 = arith.addf %53, %58 : vector<128x128xf32>
    %c0_30 = arith.constant 0 : index
    %c0_31 = arith.constant 0 : index
    %60 = vector.load %arg4[%c0_30, %c0_31] : memref<2x128xf32, #tpu.memory_space<vmem>>, vector<1x128xf32>
    %61 = vector.broadcast %60 : vector<1x128xf32> to vector<128x128xf32>
    %62 = arith.subf %59, %61 : vector<128x128xf32>
    %c1_32 = arith.constant 1 : index
    %c0_33 = arith.constant 0 : index
    %63 = vector.load %arg4[%c1_32, %c0_33] : memref<2x128xf32, #tpu.memory_space<vmem>>, vector<1x128xf32>
    %64 = vector.broadcast %63 : vector<1x128xf32> to vector<128x128xf32>
    %65 = arith.mulf %62, %64 : vector<128x128xf32>
    %cst_34 = arith.constant 0.000000e+00 : f32
    %66 = vector.broadcast %cst_34 : f32 to vector<128x128xf32>
    %67 = arith.maximumf %65, %66 : vector<128x128xf32>
    %c0_35 = arith.constant 0 : index
    %c0_36 = arith.constant 0 : index
    %c0_37 = arith.constant 0 : index
    %68 = vector.load %arg5[%c0_35, %c0_36, %c0_37] : memref<1x128x128xf32, #tpu.memory_space<vmem>>, vector<1x128x128xf32>
    %69 = vector.shape_cast %68 : vector<1x128x128xf32> to vector<128x128xf32>
    %70 = vector.shape_cast %67 : vector<128x128xf32> to vector<1x128x128xf32>
    tpu.vector_store %arg5[%c0_35, %c0_36, %c0_37], %70 {strides = array<i32>} : memref<1x128x128xf32, #tpu.memory_space<vmem>>, vector<1x128x128xf32>,
    return
  }
  func.func @transform_0(%arg0: i32, %arg1: i32) -> (i32, i32, i32, i32) {
    %c0_i32 = arith.constant 0 : i32
    %c0_i32_0 = arith.constant 0 : i32
    %c0_i32_1 = arith.constant 0 : i32
    %c0_i32_2 = arith.constant 0 : i32
    return %arg0, %c0_i32, %c0_i32_0, %c0_i32_1 : i32, i32, i32, i32
  }
  func.func @transform_1(%arg0: i32, %arg1: i32) -> (i32, i32, i32) {
    %c0_i32 = arith.constant 0 : i32
    %c0_i32_0 = arith.constant 0 : i32
    %c0_i32_1 = arith.constant 0 : i32
    %c0_i32_2 = arith.constant 0 : i32
    return %c0_i32, %c0_i32_0, %c0_i32_1 : i32, i32, i32
  }
  func.func @transform_2(%arg0: i32, %arg1: i32) -> (i32, i32) {
    %c0_i32 = arith.constant 0 : i32
    %c0_i32_0 = arith.constant 0 : i32
    %c0_i32_1 = arith.constant 0 : i32
    return %c0_i32, %c0_i32_0 : i32, i32
  }
  func.func @transform_3(%arg0: i32, %arg1: i32) -> (i32, i32, i32) {
    %c0_i32 = arith.constant 0 : i32
    %c0_i32_0 = arith.constant 0 : i32
    return %arg0, %arg1, %c0_i32 : i32, i32, i32
  }
}

</mosaic_0001>

<llo_original>
// kernel: basic_conv_block.2
$region0: #{basic_conv_block.2}
  #allocation0 [shape = 'u32[]', space=smem, size = 0x4, offset = 0x4, fixed_abs, tag = 'smem constant byte address 0x4 - core index']
  #allocation1 [shape = 'u32[72,128]{1,0:T(1,128)}', space=vmem, size = 0x9000, scoped, tag = 'internal scratch']
  %s0 = inlined_call_operand.vmem [shape: bf16[2,18,18,4], index: 0, kind: input, shape index: {}]
  %s1 = inlined_call_operand.vmem [shape: bf16[9,4,128], index: 1, kind: input, shape index: {}]
  %s2 = inlined_call_operand.vmem [shape: f32[2,2,2,128], index: 2, kind: output, shape index: {}]
  %s3 = sld [smem:[#allocation0]]
  $region41: #{basic_conv_block.2} parent=0
    _
  %s5 = ssub.s32 1, %s3
  %s6 = scalar_select 0, %s5, %s3
  loop: start=0, step=1, limit=6
  $region2: #{basic_conv_block.2} parent=0 // loop_pre_header
    _
  $region3: #{basic_conv_block.2} parent=0 // loop_header
    %s8 = sphi 0, %s12
    %p9 = scmp.ge.s32.totalorder %s8, 6
    %s15 = sphi 0, %s27
    %s16 = sphi 0, %s23
    %s17 = sphi 0, %s15
    %s18 = sphi 0, %s16
    %s19 = sphi 0, %s17
    %s20 = sphi 0, %s18
    %s30 = sphi 0, %s32
    %s33 = sphi 0, %s30
    %s34 = sphi 0, %s33
    %s50 = sphi 0, %s34
    %s54 = sphi 0, %s54
    %s56 = sphi 0, %s54
    %s57 = sphi 0, %s56
    %s71 = sphi 0, %s57
    %s79 = sphi 0, %s81
    %s82 = sphi 0, %s79
    %s83 = sphi 0, %s82
    %s99 = sphi 0, %s83
  $region4: #{basic_conv_block.2} parent=0 // loop_header_branch
    %11 = sbr.rel (%p9) target = $region8
  $region5: #{basic_conv_block.2} parent=0 // loop_body
    %s13 = ssub.s32 %s8, 1
    %s14 = ssub.s32 %s8, 2
    %s21 = sadd.s32 1, %s16
    %p22 = scmp.ge.s32.totalorder %s21, 2
    %s23 = scalar_select %p22, 0, %s21
    %s24 = sadd.s32 1, %s15
    %s25 = scalar_select %p22, %s24, %s15
    %p26 = scmp.ge.s32.totalorder %s25, 2
    %s27 = scalar_select %p26, 0, %s25
    %s28 = ssub.s32 %s15, %s27
    %p29 = scmp.eq.s32.totalorder %s28, 0
    %s31 = sadd.s32 %s30, 1
    %s32 = scalar_select %p29, %s30, %s31
    %p35 = pneg %p29
    %p36 = scmp.eq.s32.totalorder %s8, 3
    %p37 = por %p35, %p36
    %p38 = scmp.ne.s32.totalorder %s30, %s33
    %p39 = scmp.eq.s32.totalorder %s8, 0
    %p40 = por %p38, %p39
    %p41 = scmp.ne.s32.totalorder %s30, %s33
    %p42 = scmp.eq.s32.totalorder %s13, 3
    %p43 = por %p41, %p42
    %p44 = scmp.ne.s32.totalorder %s33, %s34
    %p45 = scmp.eq.s32.totalorder %s13, 0
    %p46 = por %p44, %p45
    %p47 = scmp.ne.s32.totalorder %s33, %s34
    %p48 = scmp.eq.s32.totalorder %s14, 3
    %p49 = por %p47, %p48
    %p51 = scmp.ne.s32.totalorder %s34, %s50
    %p52 = scmp.eq.s32.totalorder %s14, 0
    %p53 = por %p51, %p52
    %s55 = sadd.s32 %s54, 1
    %p58 = scmp.eq.s32.totalorder %s8, 3
    %p59 = scmp.ne.s32.totalorder %s54, %s56
    %p60 = scmp.eq.s32.totalorder %s8, 0
    %p61 = por %p59, %p60
    %p62 = scmp.ne.s32.totalorder %s54, %s56
    %p63 = scmp.eq.s32.totalorder %s13, 3
    %p64 = por %p62, %p63
    %p65 = scmp.ne.s32.totalorder %s56, %s57
    %p66 = scmp.eq.s32.totalorder %s13, 0
    %p67 = por %p65, %p66
    %p68 = scmp.ne.s32.totalorder %s56, %s57
    %p69 = scmp.eq.s32.totalorder %s14, 3
    %p70 = por %p68, %p69
    %p72 = scmp.ne.s32.totalorder %s57, %s71
    %p73 = scmp.eq.s32.totalorder %s14, 0
    %p74 = por %p72, %p73
    %s75 = ssub.s32 %s15, %s27
    %s76 = ssub.s32 %s16, %s23
    %s77 = sor.u32 %s75, %s76
    %p78 = scmp.eq.s32.totalorder %s77, 0
    %s80 = sadd.s32 %s79, 1
    %s81 = scalar_select %p78, %s79, %s80
    %p84 = pneg %p78
    %p85 = scmp.eq.s32.totalorder %s8, 3
    %p86 = por %p84, %p85
    %p87 = scmp.ne.s32.totalorder %s79, %s82
    %p88 = scmp.eq.s32.totalorder %s8, 0
    %p89 = por %p87, %p88
    %p90 = scmp.ne.s32.totalorder %s79, %s82
    %p91 = scmp.eq.s32.totalorder %s13, 3
    %p92 = por %p90, %p91
    %p93 = scmp.ne.s32.totalorder %s82, %s83
    %p94 = scmp.eq.s32.totalorder %s13, 0
    %p95 = por %p93, %p94
    %p96 = scmp.ne.s32.totalorder %s82, %s83
    %p97 = scmp.eq.s32.totalorder %s14, 3
    %p98 = por %p96, %p97
    %p100 = scmp.ne.s32.totalorder %s83, %s99
    %p101 = scmp.eq.s32.totalorder %s14, 0
    %p102 = por %p100, %p101
    %p103 = scmp.le.s32.totalorder 1, %s8
    %p104 = scmp.lt.s32.totalorder %s8, 5
    %p105 = pnand %p103, %p104
    %p106 = pneg %p105
    // Predicated region
    $region9: #{basic_conv_block.2} parent=5 // pred_check
      _
    $region10: #{basic_conv_block.2} parent=5 // pred_check_branch
      %108 = sbr.rel (%p105) target = $region12
    $region11: #{basic_conv_block.2} parent=5 // pred_region
      %s109 = ssub.s32 %s8, 1
      // Predicated region
      $region13: #{basic_conv_block.2} parent=11 // pred_check
        %p110 = pneg %p67
      $region14: #{basic_conv_block.2} parent=11 // pred_check_branch
        %112 = sbr.rel (%p110) target = $region16
      $region15: #{basic_conv_block.2} parent=11 // pred_region
        _
      $region16: #{basic_conv_block.2} parent=11 // pred_fallthru
        _
    $region12: #{basic_conv_block.2} parent=5 // pred_fallthru
      _
    %p113 = scmp.lt.s32.totalorder %s8, 4
    // Predicated region
    $region17: #{basic_conv_block.2} parent=5 // pred_check
      %p114 = pneg %p113
    $region18: #{basic_conv_block.2} parent=5 // pred_check_branch
      %116 = sbr.rel (%p114) target = $region20
    $region19: #{basic_conv_block.2} parent=5 // pred_region
      // Predicated region
      $region21: #{basic_conv_block.2} parent=19 // pred_check
        %p117 = pneg %p40
      $region22: #{basic_conv_block.2} parent=19 // pred_check_branch
        %119 = sbr.rel (%p117) target = $region24
      $region23: #{basic_conv_block.2} parent=19 // pred_region
        %p120 = scmp.lt.s32.totalorder %s15, 1
        %s121 = scalar_select %p120, %s15, 1
        %s122 = smul.addr %s121, 54
        %s123 = smul.addr %s122, 4
        %s124 = scalar_lea.vmem %s0, %s123
      $region24: #{basic_conv_block.2} parent=19 // pred_fallthru
        _
    $region20: #{basic_conv_block.2} parent=5 // pred_fallthru
      _
    %p125 = scmp.le.s32.totalorder 1, %s8
    %p126 = scmp.lt.s32.totalorder %s8, 5
    %p127 = pnand %p125, %p126
    %p128 = pneg %p127
    // Predicated region
    $region25: #{basic_conv_block.2} parent=5 // pred_check
      _
    $region26: #{basic_conv_block.2} parent=5 // pred_check_branch
      %130 = sbr.rel (%p127) target = $region28
    $region27: #{basic_conv_block.2} parent=5 // pred_region
      %s131 = ssub.s32 %s8, 1
      %p132 = scmp.lt.s32.totalorder %s17, 1
      %s133 = scalar_select %p132, %s17, 1
      %s134 = smul.addr %s133, 54
      %s135 = smul.addr %s134, 4
      %s136 = scalar_lea.vmem %s0, %s135
      %p137 = pneg %p46
      %p138 = pneg %p43
      %p139 = pneg %p67
      %p140 = pneg %p64
      %p141 = pneg %p95
      %p142 = pneg %p92
      %p143 = scmp.lt.s32.totalorder %s17, 1
      %s144 = scalar_select %p143, %s17, 1
      %p145 = scmp.lt.s32.totalorder %s18, 1
      %s146 = scalar_select %p145, %s18, 1
      %s147 = smul.addr %s144, 2
      %s148 = sadd.s32 %s146, %s147
      %s149 = smul.addr %s148, 2
      %s150 = scalar_lea.vmem %s2, %s149
      %p151 = scmp.lt.s32.totalorder %s17, 1
      %s152 = scalar_select %p151, %s17, 1
      %s153 = smul.addr %s152, 54
      %s154 = smul.addr %s153, 4
      %s155 = scalar_lea.vmem %s0, %s154
      %p156 = scmp.lt.s32.totalorder %s17, 1
      %s157 = scalar_select %p156, %s17, 1
      %p158 = scmp.lt.s32.totalorder %s18, 1
      %s159 = scalar_select %p158, %s18, 1
      %s160 = smul.addr %s157, 2
      %s161 = sadd.s32 %s159, %s160
      %s162 = smul.addr %s161, 2
      %s163 = scalar_lea.vmem %s2, %s162
      %s165 = smul.u32 %s18, 8
      %s166 = smul.u32 %s165, 3
      %s167 = smul.addr %s166, 4
      %s168 = scalar_lea.vmem %s155, %s167
      %v169 = vld [vmem:[%s168] sm:$0xf]
      %v170 = vld [vmem:[%s168 + $0x4] sm:$0xf]
      %v171 = vld [vmem:[%s168 + $0x8] sm:$0x1]
      %v172 = vld [vmem:[%s168 + $0xc] sm:$0xf]
      %v173 = vld [vmem:[%s168 + $0x10] sm:$0xf]
      %v174 = vld [vmem:[%s168 + $0x14] sm:$0x1]
      %v175 = vld [vmem:[%s168 + $0x18] sm:$0xf]
      %v176 = vld [vmem:[%s168 + $0x1c] sm:$0xf]
      %v177 = vld [vmem:[%s168 + $0x20] sm:$0x1]
      %v178 = vld [vmem:[%s168 + $0x24] sm:$0xf]
      %v179 = vld [vmem:[%s168 + $0x28] sm:$0xf]
      %v180 = vld [vmem:[%s168 + $0x2c] sm:$0x1]
      %v181 = vld [vmem:[%s168 + $0x30] sm:$0xf]
      %v182 = vld [vmem:[%s168 + $0x34] sm:$0xf]
      %v183 = vld [vmem:[%s168 + $0x38] sm:$0x1]
      %v184 = vld [vmem:[%s168 + $0x3c] sm:$0xf]
      %v185 = vld [vmem:[%s168 + $0x40] sm:$0xf]
      %v186 = vld [vmem:[%s168 + $0x44] sm:$0x1]
      %v187 = vld [vmem:[%s168 + $0x48] sm:$0xf]
      %v188 = vld [vmem:[%s168 + $0x4c] sm:$0xf]
      %v189 = vld [vmem:[%s168 + $0x50] sm:$0x1]
      %v190 = vld [vmem:[%s168 + $0x54] sm:$0xf]
      %v191 = vld [vmem:[%s168 + $0x58] sm:$0xf]
      %v192 = vld [vmem:[%s168 + $0x5c] sm:$0x1]
      %v193 = vld [vmem:[%s168 + $0x60] sm:$0xf]
      %v194 = vld [vmem:[%s168 + $0x64] sm:$0xf]
      %v195 = vld [vmem:[%s168 + $0x68] sm:$0x1]
      %v196 = vld [vmem:[%s168 + $0x6c] sm:$0xf]
      %v197 = vld [vmem:[%s168 + $0x70] sm:$0xf]
      %v198 = vld [vmem:[%s168 + $0x74] sm:$0x1]
      %v199 = vld [vmem:[%s1] sm:$0x3]
      %vm200 = vsmask.f32 3328
      %vm201 = vsmask.f32 7440
      %vm202 = vmor %vm200, %vm201
      %v204 = vshrl.u32 %v169, 16
      %v206 = vrot.slane %v204, 4
      %v207 = vshll.u32 %v169, 16
      %v209 = vrot.slane %v207, 5
      %v210 = vor.u32 %v206, %v209
      %v211 = vrot.slane %v210, 4
      %v213 = vshll.u32 %v170, 16
      %v215 = vrot.slane %v213, 5
      %v216 = vsel %vm202, %v211, %v215
      %v217 = vshrl.u32 %v170, 16
      %v219 = vrot.slane %v217, 4
      %v220 = vor.u32 %v219, %v215
      %v221 = vrot.slane %v220, 4
      %v223 = vshll.u32 %v171, 16
      %v225 = vrot.slane %v223, 5
      %v226 = vsel %vm202, %v221, %v225
      %v228 = vshrl.u32 %v172, 16
      %v230 = vrot.slane %v228, 4
      %v231 = vshll.u32 %v172, 16
      %v233 = vrot.slane %v231, 5
      %v234 = vor.u32 %v230, %v233
      %v235 = vrot.slane %v234, 4
      %v237 = vshll.u32 %v173, 16
      %v239 = vrot.slane %v237, 5
      %v240 = vsel %vm202, %v235, %v239
      %v241 = vshrl.u32 %v173, 16
      %v243 = vrot.slane %v241, 4
      %v244 = vor.u32 %v243, %v239
      %v245 = vrot.slane %v244, 4
      %v247 = vshll.u32 %v174, 16
      %v249 = vrot.slane %v247, 5
      %v250 = vsel %vm202, %v245, %v249
      %v252 = vshrl.u32 %v175, 16
      %v254 = vrot.slane %v252, 4
      %v255 = vshll.u32 %v175, 16
      %v257 = vrot.slane %v255, 5
      %v258 = vor.u32 %v254, %v257
      %v259 = vrot.slane %v258, 4
      %v261 = vshll.u32 %v176, 16
      %v263 = vrot.slane %v261, 5
      %v264 = vsel %vm202, %v259, %v263
      %v265 = vshrl.u32 %v176, 16
      %v267 = vrot.slane %v265, 4
      %v268 = vor.u32 %v267, %v263
      %v269 = vrot.slane %v268, 4
      %v271 = vshll.u32 %v177, 16
      %v273 = vrot.slane %v271, 5
      %v274 = vsel %vm202, %v269, %v273
      %v276 = vshrl.u32 %v178, 16
      %v278 = vrot.slane %v276, 4
      %v279 = vshll.u32 %v178, 16
      %v281 = vrot.slane %v279, 5
      %v282 = vor.u32 %v278, %v281
      %v283 = vrot.slane %v282, 4
      %v285 = vshll.u32 %v179, 16
      %v287 = vrot.slane %v285, 5
      %v288 = vsel %vm202, %v283, %v287
      %v289 = vshrl.u32 %v179, 16
      %v291 = vrot.slane %v289, 4
      %v292 = vor.u32 %v291, %v287
      %v293 = vrot.slane %v292, 4
      %v295 = vshll.u32 %v180, 16
      %v297 = vrot.slane %v295, 5
      %v298 = vsel %vm202, %v293, %v297
      %v300 = vshrl.u32 %v181, 16
      %v302 = vrot.slane %v300, 4
      %v303 = vshll.u32 %v181, 16
      %v305 = vrot.slane %v303, 5
      %v306 = vor.u32 %v302, %v305
      %v307 = vrot.slane %v306, 4
      %v309 = vshll.u32 %v182, 16
      %v311 = vrot.slane %v309, 5
      %v312 = vsel %vm202, %v307, %v311
      %v313 = vshrl.u32 %v182, 16
      %v315 = vrot.slane %v313, 4
      %v316 = vor.u32 %v315, %v311
      %v317 = vrot.slane %v316, 4
      %v319 = vshll.u32 %v183, 16
      %v321 = vrot.slane %v319, 5
      %v322 = vsel %vm202, %v317, %v321
      %v324 = vshrl.u32 %v184, 16
      %v326 = vrot.slane %v324, 4
      %v327 = vshll.u32 %v184, 16
      %v329 = vrot.slane %v327, 5
      %v330 = vor.u32 %v326, %v329
      %v331 = vrot.slane %v330, 4
      %v333 = vshll.u32 %v185, 16
      %v335 = vrot.slane %v333, 5
      %v336 = vsel %vm202, %v331, %v335
      %v337 = vshrl.u32 %v185, 16
      %v339 = vrot.slane %v337, 4
      %v340 = vor.u32 %v339, %v335
      %v341 = vrot.slane %v340, 4
      %v343 = vshll.u32 %v186, 16
      %v345 = vrot.slane %v343, 5
      %v346 = vsel %vm202, %v341, %v345
      %v348 = vshrl.u32 %v187, 16
      %v350 = vrot.slane %v348, 4
      %v351 = vshll.u32 %v187, 16
      %v353 = vrot.slane %v351, 5
      %v354 = vor.u32 %v350, %v353
      %v355 = vrot.slane %v354, 4
      %v357 = vshll.u32 %v188, 16
      %v359 = vrot.slane %v357, 5
      %v360 = vsel %vm202, %v355, %v359
      %v361 = vshrl.u32 %v188, 16
      %v363 = vrot.slane %v361, 4
      %v364 = vor.u32 %v363, %v359
      %v365 = vrot.slane %v364, 4
      %v367 = vshll.u32 %v189, 16
      %v369 = vrot.slane %v367, 5
      %v370 = vsel %vm202, %v365, %v369
      %v372 = vshrl.u32 %v190, 16
      %v374 = vrot.slane %v372, 4
      %v375 = vshll.u32 %v190, 16
      %v377 = vrot.slane %v375, 5
      %v378 = vor.u32 %v374, %v377
      %v379 = vrot.slane %v378, 4
      %v381 = vshll.u32 %v191, 16
      %v383 = vrot.slane %v381, 5
      %v384 = vsel %vm202, %v379, %v383
      %v385 = vshrl.u32 %v191, 16
      %v387 = vrot.slane %v385, 4
      %v388 = vor.u32 %v387, %v383
      %v389 = vrot.slane %v388, 4
      %v391 = vshll.u32 %v192, 16
      %v393 = vrot.slane %v391, 5
      %v394 = vsel %vm202, %v389, %v393
      %s395 = scalar_lea.vmem %s1, 2
      %v396 = vld [vmem:[%s395] sm:$0x3]
      %v397 = vunpack.c.l.b16 %v216
      %v398 = vunpack.c.l.b16 %v226
      %v399 = vunpack.c.l.b16 %v240
      %v400 = vunpack.c.l.b16 %v250
      %v401 = vunpack.c.l.b16 %v264
      %v402 = vunpack.c.l.b16 %v274
      %v403 = vunpack.c.l.b16 %v288
      %v404 = vunpack.c.l.b16 %v298
      %v405 = vunpack.c.l.b16 %v312
      %v406 = vunpack.c.l.b16 %v322
      %v407 = vunpack.c.l.b16 %v336
      %v408 = vunpack.c.l.b16 %v346
      %v409 = vunpack.c.l.b16 %v360
      %v410 = vunpack.c.l.b16 %v370
      %v411 = vunpack.c.l.b16 %v384
      %v412 = vunpack.c.l.b16 %v394
      %v413 = vpack.c.b16 %v398, %v397
      %v414 = vpack.c.b16 %v400, %v399
      %v415 = vpack.c.b16 %v402, %v401
      %v416 = vpack.c.b16 %v404, %v403
      %v417 = vpack.c.b16 %v406, %v405
      %v418 = vpack.c.b16 %v408, %v407
      %v419 = vpack.c.b16 %v410, %v409
      %v420 = vpack.c.b16 %v412, %v411
      %vm421 = vcmask 31744
      %v423 = vsel %vm421, %v413, 0
      %v426 = vsel %vm421, %v414, 0
      %v429 = vsel %vm421, %v415, 0
      %v432 = vsel %vm421, %v416, 0
      %v435 = vsel %vm421, %v417, 0
      %v438 = vsel %vm421, %v418, 0
      %v441 = vsel %vm421, %v419, 0
      %v444 = vsel %vm421, %v420, 0
      %vm446 = vcmask 1041408
      %v448 = vsel %vm446, %v396, 0
      %450 = vmatpush.bf16.msra.mxu0 0
      %451 = vmatpush.bf16.msra.mxu0 0
      %452 = vmatpush.bf16.msra.mxu0 0
      %453 = vmatpush.bf16.msra.mxu0 0
      %454 = vmatpush.bf16.msra.mxu0 0
      %455 = vmatpush.bf16.msra.mxu0 0
      %456 = vmatpush.bf16.msra.mxu0 0
      %457 = vmatpush.bf16.msra.mxu0 %v448
      %458 = vmatmul.bf16.gmra.mxu0 %v423
      %v459 = vpop.f32.mrf.mxu0
      %v460 = vadd.f32 0.0, %v459
      %v461 = vpop.f32.mrf.mxu0
      %v462 = vadd.f32 0.0, %v461
      %463 = vmatmul.bf16.gmra.mxu0 %v426
      %v464 = vpop.f32.mrf.mxu0
      %v465 = vadd.f32 0.0, %v464
      %v466 = vpop.f32.mrf.mxu0
      %v467 = vadd.f32 0.0, %v466
      %468 = vmatmul.bf16.gmra.mxu0 %v429
      %v469 = vpop.f32.mrf.mxu0
      %v470 = vadd.f32 0.0, %v469
      %v471 = vpop.f32.mrf.mxu0
      %v472 = vadd.f32 0.0, %v471
      %473 = vmatmul.bf16.gmra.mxu0 %v432
      %v474 = vpop.f32.mrf.mxu0
      %v475 = vadd.f32 0.0, %v474
      %v476 = vpop.f32.mrf.mxu0
      %v477 = vadd.f32 0.0, %v476
      %478 = vmatmul.bf16.gmra.mxu0 %v435
      %v479 = vpop.f32.mrf.mxu0
      %v480 = vadd.f32 0.0, %v479
      %v481 = vpop.f32.mrf.mxu0
      %v482 = vadd.f32 0.0, %v481
      %483 = vmatmul.bf16.gmra.mxu0 %v438
      %v484 = vpop.f32.mrf.mxu0
      %v485 = vadd.f32 0.0, %v484
      %v486 = vpop.f32.mrf.mxu0
      %v487 = vadd.f32 0.0, %v486
      %488 = vmatmul.bf16.gmra.mxu0 %v441
      %v489 = vpop.f32.mrf.mxu0
      %v490 = vadd.f32 0.0, %v489
      %v491 = vpop.f32.mrf.mxu0
      %v492 = vadd.f32 0.0, %v491
      %493 = vmatmul.bf16.gmra.mxu0 %v444
      %v494 = vpop.f32.mrf.mxu0
      %v495 = vadd.f32 0.0, %v494
      %v496 = vpop.f32.mrf.mxu0
      %v497 = vadd.f32 0.0, %v496
      %498 = vdwg.mxu0
      %v515 = vunpack.c.l.b16 %v169
      %v516 = vunpack.c.l.b16 %v170
      %v517 = vunpack.c.l.b16 %v172
      %v518 = vunpack.c.l.b16 %v173
      %v519 = vunpack.c.l.b16 %v175
      %v520 = vunpack.c.l.b16 %v176
      %v521 = vunpack.c.l.b16 %v178
      %v522 = vunpack.c.l.b16 %v179
      %v523 = vunpack.c.l.b16 %v181
      %v524 = vunpack.c.l.b16 %v182
      %v525 = vunpack.c.l.b16 %v184
      %v526 = vunpack.c.l.b16 %v185
      %v527 = vunpack.c.l.b16 %v187
      %v528 = vunpack.c.l.b16 %v188
      %v529 = vunpack.c.l.b16 %v190
      %v530 = vunpack.c.l.b16 %v191
      %v531 = vpack.c.b16 %v516, %v515
      %v532 = vpack.c.b16 %v518, %v517
      %v533 = vpack.c.b16 %v520, %v519
      %v534 = vpack.c.b16 %v522, %v521
      %v535 = vpack.c.b16 %v524, %v523
      %v536 = vpack.c.b16 %v526, %v525
      %v537 = vpack.c.b16 %v528, %v527
      %v538 = vpack.c.b16 %v530, %v529
      %v540 = vsel %vm421, %v531, 0
      %v543 = vsel %vm421, %v532, 0
      %v546 = vsel %vm421, %v533, 0
      %v549 = vsel %vm421, %v534, 0
      %v552 = vsel %vm421, %v535, 0
      %v555 = vsel %vm421, %v536, 0
      %v558 = vsel %vm421, %v537, 0
      %v561 = vsel %vm421, %v538, 0
      %v564 = vsel %vm446, %v199, 0
      %566 = vmatpush.bf16.msra.mxu0 0
      %567 = vmatpush.bf16.msra.mxu0 0
      %568 = vmatpush.bf16.msra.mxu0 0
      %569 = vmatpush.bf16.msra.mxu0 0
      %570 = vmatpush.bf16.msra.mxu0 0
      %571 = vmatpush.bf16.msra.mxu0 0
      %572 = vmatpush.bf16.msra.mxu0 0
      %573 = vmatpush.bf16.msra.mxu0 %v564
      %574 = vmatmul.bf16.gmra.mxu0 %v540
      %v575 = vpop.f32.mrf.mxu0
      %v576 = vadd.f32 %v460, %v575
      %v577 = vpop.f32.mrf.mxu0
      %v578 = vadd.f32 %v462, %v577
      %579 = vmatmul.bf16.gmra.mxu0 %v543
      %v580 = vpop.f32.mrf.mxu0
      %v581 = vadd.f32 %v465, %v580
      %v582 = vpop.f32.mrf.mxu0
      %v583 = vadd.f32 %v467, %v582
      %584 = vmatmul.bf16.gmra.mxu0 %v546
      %v585 = vpop.f32.mrf.mxu0
      %v586 = vadd.f32 %v470, %v585
      %v587 = vpop.f32.mrf.mxu0
      %v588 = vadd.f32 %v472, %v587
      %589 = vmatmul.bf16.gmra.mxu0 %v549
      %v590 = vpop.f32.mrf.mxu0
      %v591 = vadd.f32 %v475, %v590
      %v592 = vpop.f32.mrf.mxu0
      %v593 = vadd.f32 %v477, %v592
      %594 = vmatmul.bf16.gmra.mxu0 %v552
      %v595 = vpop.f32.mrf.mxu0
      %v596 = vadd.f32 %v480, %v595
      %v597 = vpop.f32.mrf.mxu0
      %v598 = vadd.f32 %v482, %v597
      %599 = vmatmul.bf16.gmra.mxu0 %v555
      %v600 = vpop.f32.mrf.mxu0
      %v601 = vadd.f32 %v485, %v600
      %v602 = vpop.f32.mrf.mxu0
      %v603 = vadd.f32 %v487, %v602
      %604 = vmatmul.bf16.gmra.mxu0 %v558
      %v605 = vpop.f32.mrf.mxu0
      %v606 = vadd.f32 %v490, %v605
      %v607 = vpop.f32.mrf.mxu0
      %v608 = vadd.f32 %v492, %v607
      %609 = vmatmul.bf16.gmra.mxu0 %v561
      %v610 = vpop.f32.mrf.mxu0
      %v611 = vadd.f32 %v495, %v610
      %v612 = vpop.f32.mrf.mxu0
      %v613 = vadd.f32 %v497, %v612
      %614 = vdwg.mxu0
      %vm623 = vcmask 1042432
      %vm624 = vcmask 1046532
      %vm625 = vmor %vm623, %vm624
      %v626 = vrot.slane %v169, 5
      %v627 = vrot.slane %v626, 4
      %v628 = vrot.slane %v170, 5
      %v629 = vsel %vm625, %v627, %v628
      %v630 = vrot.slane %v628, 4
      %v631 = vrot.slane %v171, 5
      %v632 = vsel %vm625, %v630, %v631
      %v633 = vrot.slane %v172, 5
      %v634 = vrot.slane %v633, 4
      %v635 = vrot.slane %v173, 5
      %v636 = vsel %vm625, %v634, %v635
      %v637 = vrot.slane %v635, 4
      %v638 = vrot.slane %v174, 5
      %v639 = vsel %vm625, %v637, %v638
      %v640 = vrot.slane %v175, 5
      %v641 = vrot.slane %v640, 4
      %v642 = vrot.slane %v176, 5
      %v643 = vsel %vm625, %v641, %v642
      %v644 = vrot.slane %v642, 4
      %v645 = vrot.slane %v177, 5
      %v646 = vsel %vm625, %v644, %v645
      %v647 = vrot.slane %v178, 5
      %v648 = vrot.slane %v647, 4
      %v649 = vrot.slane %v179, 5
      %v650 = vsel %vm625, %v648, %v649
      %v651 = vrot.slane %v649, 4
      %v652 = vrot.slane %v180, 5
      %v653 = vsel %vm625, %v651, %v652
      %v654 = vrot.slane %v181, 5
      %v655 = vrot.slane %v654, 4
      %v656 = vrot.slane %v182, 5
      %v657 = vsel %vm625, %v655, %v656
      %v658 = vrot.slane %v656, 4
      %v659 = vrot.slane %v183, 5
      %v660 = vsel %vm625, %v658, %v659
      %v661 = vrot.slane %v184, 5
      %v662 = vrot.slane %v661, 4
      %v663 = vrot.slane %v185, 5
      %v664 = vsel %vm625, %v662, %v663
      %v665 = vrot.slane %v663, 4
      %v666 = vrot.slane %v186, 5
      %v667 = vsel %vm625, %v665, %v666
      %v668 = vrot.slane %v187, 5
      %v669 = vrot.slane %v668, 4
      %v670 = vrot.slane %v188, 5
      %v671 = vsel %vm625, %v669, %v670
      %v672 = vrot.slane %v670, 4
      %v673 = vrot.slane %v189, 5
      %v674 = vsel %vm625, %v672, %v673
      %v675 = vrot.slane %v190, 5
      %v676 = vrot.slane %v675, 4
      %v677 = vrot.slane %v191, 5
      %v678 = vsel %vm625, %v676, %v677
      %v679 = vrot.slane %v677, 4
      %v680 = vrot.slane %v192, 5
      %v681 = vsel %vm625, %v679, %v680
      %s682 = scalar_lea.vmem %s1, 4
      %v683 = vld [vmem:[%s682] sm:$0x3]
      %v684 = vunpack.c.l.b16 %v629
      %v685 = vunpack.c.l.b16 %v632
      %v686 = vunpack.c.l.b16 %v636
      %v687 = vunpack.c.l.b16 %v639
      %v688 = vunpack.c.l.b16 %v643
      %v689 = vunpack.c.l.b16 %v646
      %v690 = vunpack.c.l.b16 %v650
      %v691 = vunpack.c.l.b16 %v653
      %v692 = vunpack.c.l.b16 %v657
      %v693 = vunpack.c.l.b16 %v660
      %v694 = vunpack.c.l.b16 %v664
      %v695 = vunpack.c.l.b16 %v667
      %v696 = vunpack.c.l.b16 %v671
      %v697 = vunpack.c.l.b16 %v674
      %v698 = vunpack.c.l.b16 %v678
      %v699 = vunpack.c.l.b16 %v681
      %v700 = vpack.c.b16 %v685, %v684
      %v701 = vpack.c.b16 %v687, %v686
      %v702 = vpack.c.b16 %v689, %v688
      %v703 = vpack.c.b16 %v691, %v690
      %v704 = vpack.c.b16 %v693, %v692
      %v705 = vpack.c.b16 %v695, %v694
      %v706 = vpack.c.b16 %v697, %v696
      %v707 = vpack.c.b16 %v699, %v698
      %v709 = vsel %vm421, %v700, 0
      %v712 = vsel %vm421, %v701, 0
      %v715 = vsel %vm421, %v702, 0
      %v718 = vsel %vm421, %v703, 0
      %v721 = vsel %vm421, %v704, 0
      %v724 = vsel %vm421, %v705, 0
      %v727 = vsel %vm421, %v706, 0
      %v730 = vsel %vm421, %v707, 0
      %v733 = vsel %vm446, %v683, 0
      %735 = vmatpush.bf16.msra.mxu0 0
      %736 = vmatpush.bf16.msra.mxu0 0
      %737 = vmatpush.bf16.msra.mxu0 0
      %738 = vmatpush.bf16.msra.mxu0 0
      %739 = vmatpush.bf16.msra.mxu0 0
      %740 = vmatpush.bf16.msra.mxu0 0
      %741 = vmatpush.bf16.msra.mxu0 0
      %742 = vmatpush.bf16.msra.mxu0 %v733
      %743 = vmatmul.bf16.gmra.mxu0 %v709
      %v744 = vpop.f32.mrf.mxu0
      %v745 = vadd.f32 0.0, %v744
      %v746 = vpop.f32.mrf.mxu0
      %v747 = vadd.f32 0.0, %v746
      %748 = vmatmul.bf16.gmra.mxu0 %v712
      %v749 = vpop.f32.mrf.mxu0
      %v750 = vadd.f32 0.0, %v749
      %v751 = vpop.f32.mrf.mxu0
      %v752 = vadd.f32 0.0, %v751
      %753 = vmatmul.bf16.gmra.mxu0 %v715
      %v754 = vpop.f32.mrf.mxu0
      %v755 = vadd.f32 0.0, %v754
      %v756 = vpop.f32.mrf.mxu0
      %v757 = vadd.f32 0.0, %v756
      %758 = vmatmul.bf16.gmra.mxu0 %v718
      %v759 = vpop.f32.mrf.mxu0
      %v760 = vadd.f32 0.0, %v759
      %v761 = vpop.f32.mrf.mxu0
      %v762 = vadd.f32 0.0, %v761
      %763 = vmatmul.bf16.gmra.mxu0 %v721
      %v764 = vpop.f32.mrf.mxu0
      %v765 = vadd.f32 0.0, %v764
      %v766 = vpop.f32.mrf.mxu0
      %v767 = vadd.f32 0.0, %v766
      %768 = vmatmul.bf16.gmra.mxu0 %v724
      %v769 = vpop.f32.mrf.mxu0
      %v770 = vadd.f32 0.0, %v769
      %v771 = vpop.f32.mrf.mxu0
      %v772 = vadd.f32 0.0, %v771
      %773 = vmatmul.bf16.gmra.mxu0 %v727
      %v774 = vpop.f32.mrf.mxu0
      %v775 = vadd.f32 0.0, %v774
      %v776 = vpop.f32.mrf.mxu0
      %v777 = vadd.f32 0.0, %v776
      %778 = vmatmul.bf16.gmra.mxu0 %v730
      %v779 = vpop.f32.mrf.mxu0
      %v780 = vadd.f32 0.0, %v779
      %v781 = vpop.f32.mrf.mxu0
      %v782 = vadd.f32 0.0, %v781
      %783 = vdwg.mxu0
      %v784 = vadd.f32 %v576, %v745
      %v785 = vadd.f32 %v578, %v747
      %v786 = vadd.f32 %v581, %v750
      %v787 = vadd.f32 %v583, %v752
      %v788 = vadd.f32 %v586, %v755
      %v789 = vadd.f32 %v588, %v757
      %v790 = vadd.f32 %v591, %v760
      %v791 = vadd.f32 %v593, %v762
      %v792 = vadd.f32 %v596, %v765
      %v793 = vadd.f32 %v598, %v767
      %v794 = vadd.f32 %v601, %v770
      %v795 = vadd.f32 %v603, %v772
      %v796 = vadd.f32 %v606, %v775
      %v797 = vadd.f32 %v608, %v777
      %v798 = vadd.f32 %v611, %v780
      %v799 = vadd.f32 %v613, %v782
      %s800 = scalar_lea.vmem %s1, 6
      %v801 = vld [vmem:[%s800] sm:$0x3]
      %v804 = vunpack.c.l.b16 %v193
      %v805 = vunpack.c.l.b16 %v194
      %v806 = vpack.c.b16 %v805, %v804
      %v808 = vsel %vm421, %v806, 0
      %v811 = vsel %vm446, %v801, 0
      %813 = vmatpush.bf16.msra.mxu0 0
      %814 = vmatpush.bf16.msra.mxu0 0
      %815 = vmatpush.bf16.msra.mxu0 0
      %816 = vmatpush.bf16.msra.mxu0 0
      %817 = vmatpush.bf16.msra.mxu0 0
      %818 = vmatpush.bf16.msra.mxu0 0
      %819 = vmatpush.bf16.msra.mxu0 0
      %820 = vmatpush.bf16.msra.mxu0 %v811
      %821 = vmatmul.bf16.gmra.mxu0 %v543
      %v822 = vpop.f32.mrf.mxu0
      %v823 = vadd.f32 0.0, %v822
      %v824 = vpop.f32.mrf.mxu0
      %v825 = vadd.f32 0.0, %v824
      %826 = vmatmul.bf16.gmra.mxu0 %v546
      %v827 = vpop.f32.mrf.mxu0
      %v828 = vadd.f32 0.0, %v827
      %v829 = vpop.f32.mrf.mxu0
      %v830 = vadd.f32 0.0, %v829
      %831 = vmatmul.bf16.gmra.mxu0 %v549
      %v832 = vpop.f32.mrf.mxu0
      %v833 = vadd.f32 0.0, %v832
      %v834 = vpop.f32.mrf.mxu0
      %v835 = vadd.f32 0.0, %v834
      %836 = vmatmul.bf16.gmra.mxu0 %v552
      %v837 = vpop.f32.mrf.mxu0
      %v838 = vadd.f32 0.0, %v837
      %v839 = vpop.f32.mrf.mxu0
      %v840 = vadd.f32 0.0, %v839
      %841 = vmatmul.bf16.gmra.mxu0 %v555
      %v842 = vpop.f32.mrf.mxu0
      %v843 = vadd.f32 0.0, %v842
      %v844 = vpop.f32.mrf.mxu0
      %v845 = vadd.f32 0.0, %v844
      %846 = vmatmul.bf16.gmra.mxu0 %v558
      %v847 = vpop.f32.mrf.mxu0
      %v848 = vadd.f32 0.0, %v847
      %v849 = vpop.f32.mrf.mxu0
      %v850 = vadd.f32 0.0, %v849
      %851 = vmatmul.bf16.gmra.mxu0 %v561
      %v852 = vpop.f32.mrf.mxu0
      %v853 = vadd.f32 0.0, %v852
      %v854 = vpop.f32.mrf.mxu0
      %v855 = vadd.f32 0.0, %v854
      %856 = vmatmul.bf16.gmra.mxu0 %v808
      %v857 = vpop.f32.mrf.mxu0
      %v858 = vadd.f32 0.0, %v857
      %v859 = vpop.f32.mrf.mxu0
      %v860 = vadd.f32 0.0, %v859
      %861 = vdwg.mxu0
      %v862 = vadd.f32 %v784, %v823
      %v863 = vadd.f32 %v785, %v825
      %v864 = vadd.f32 %v786, %v828
      %v865 = vadd.f32 %v787, %v830
      %v866 = vadd.f32 %v788, %v833
      %v867 = vadd.f32 %v789, %v835
      %v868 = vadd.f32 %v790, %v838
      %v869 = vadd.f32 %v791, %v840
      %v870 = vadd.f32 %v792, %v843
      %v871 = vadd.f32 %v793, %v845
      %v872 = vadd.f32 %v794, %v848
      %v873 = vadd.f32 %v795, %v850
      %v874 = vadd.f32 %v796, %v853
      %v875 = vadd.f32 %v797, %v855
      %v876 = vadd.f32 %v798, %v858
      %v877 = vadd.f32 %v799, %v860
      %v879 = vshrl.u32 %v193, 16
      %v881 = vrot.slane %v879, 4
      %v882 = vshll.u32 %v193, 16
      %v884 = vrot.slane %v882, 5
      %v885 = vor.u32 %v881, %v884
      %v886 = vrot.slane %v885, 4
      %v888 = vshll.u32 %v194, 16
      %v890 = vrot.slane %v888, 5
      %v891 = vsel %vm202, %v886, %v890
      %v892 = vshrl.u32 %v194, 16
      %v894 = vrot.slane %v892, 4
      %v895 = vor.u32 %v894, %v890
      %v896 = vrot.slane %v895, 4
      %v898 = vshll.u32 %v195, 16
      %v900 = vrot.slane %v898, 5
      %v901 = vsel %vm202, %v896, %v900
      %s902 = scalar_lea.vmem %s1, 8
      %v903 = vld [vmem:[%s902] sm:$0x3]
      %v904 = vunpack.c.l.b16 %v891
      %v905 = vunpack.c.l.b16 %v901
      %v906 = vpack.c.b16 %v905, %v904
      %v908 = vsel %vm421, %v906, 0
      %v911 = vsel %vm446, %v903, 0
      %913 = vmatpush.bf16.msra.mxu0 0
      %914 = vmatpush.bf16.msra.mxu0 0
      %915 = vmatpush.bf16.msra.mxu0 0
      %916 = vmatpush.bf16.msra.mxu0 0
      %917 = vmatpush.bf16.msra.mxu0 0
      %918 = vmatpush.bf16.msra.mxu0 0
      %919 = vmatpush.bf16.msra.mxu0 0
      %920 = vmatpush.bf16.msra.mxu0 %v911
      %921 = vmatmul.bf16.gmra.mxu0 %v426
      %v922 = vpop.f32.mrf.mxu0
      %v923 = vadd.f32 0.0, %v922
      %v924 = vpop.f32.mrf.mxu0
      %v925 = vadd.f32 0.0, %v924
      %926 = vmatmul.bf16.gmra.mxu0 %v429
      %v927 = vpop.f32.mrf.mxu0
      %v928 = vadd.f32 0.0, %v927
      %v929 = vpop.f32.mrf.mxu0
      %v930 = vadd.f32 0.0, %v929
      %931 = vmatmul.bf16.gmra.mxu0 %v432
      %v932 = vpop.f32.mrf.mxu0
      %v933 = vadd.f32 0.0, %v932
      %v934 = vpop.f32.mrf.mxu0
      %v935 = vadd.f32 0.0, %v934
      %936 = vmatmul.bf16.gmra.mxu0 %v435
      %v937 = vpop.f32.mrf.mxu0
      %v938 = vadd.f32 0.0, %v937
      %v939 = vpop.f32.mrf.mxu0
      %v940 = vadd.f32 0.0, %v939
      %941 = vmatmul.bf16.gmra.mxu0 %v438
      %v942 = vpop.f32.mrf.mxu0
      %v943 = vadd.f32 0.0, %v942
      %v944 = vpop.f32.mrf.mxu0
      %v945 = vadd.f32 0.0, %v944
      %946 = vmatmul.bf16.gmra.mxu0 %v441
      %v947 = vpop.f32.mrf.mxu0
      %v948 = vadd.f32 0.0, %v947
      %v949 = vpop.f32.mrf.mxu0
      %v950 = vadd.f32 0.0, %v949
      %951 = vmatmul.bf16.gmra.mxu0 %v444
      %v952 = vpop.f32.mrf.mxu0
      %v953 = vadd.f32 0.0, %v952
      %v954 = vpop.f32.mrf.mxu0
      %v955 = vadd.f32 0.0, %v954
      %956 = vmatmul.bf16.gmra.mxu0 %v908
      %v957 = vpop.f32.mrf.mxu0
      %v958 = vadd.f32 0.0, %v957
      %v959 = vpop.f32.mrf.mxu0
      %v960 = vadd.f32 0.0, %v959
      %961 = vdwg.mxu0
      %v962 = vadd.f32 %v862, %v923
      %v963 = vadd.f32 %v863, %v925
      %v964 = vadd.f32 %v864, %v928
      %v965 = vadd.f32 %v865, %v930
      %v966 = vadd.f32 %v866, %v933
      %v967 = vadd.f32 %v867, %v935
      %v968 = vadd.f32 %v868, %v938
      %v969 = vadd.f32 %v869, %v940
      %v970 = vadd.f32 %v870, %v943
      %v971 = vadd.f32 %v871, %v945
      %v972 = vadd.f32 %v872, %v948
      %v973 = vadd.f32 %v873, %v950
      %v974 = vadd.f32 %v874, %v953
      %v975 = vadd.f32 %v875, %v955
      %v976 = vadd.f32 %v876, %v958
      %v977 = vadd.f32 %v877, %v960
      %v979 = vrot.slane %v193, 5
      %v980 = vrot.slane %v979, 4
      %v981 = vrot.slane %v194, 5
      %v982 = vsel %vm625, %v980, %v981
      %v983 = vrot.slane %v981, 4
      %v984 = vrot.slane %v195, 5
      %v985 = vsel %vm625, %v983, %v984
      %s986 = scalar_lea.vmem %s1, 10
      %v987 = vld [vmem:[%s986] sm:$0x3]
      %v988 = vunpack.c.l.b16 %v982
      %v989 = vunpack.c.l.b16 %v985
      %v990 = vpack.c.b16 %v989, %v988
      %v992 = vsel %vm421, %v990, 0
      %v995 = vsel %vm446, %v987, 0
      %997 = vmatpush.bf16.msra.mxu0 0
      %998 = vmatpush.bf16.msra.mxu0 0
      %999 = vmatpush.bf16.msra.mxu0 0
      %1000 = vmatpush.bf16.msra.mxu0 0
      %1001 = vmatpush.bf16.msra.mxu0 0
      %1002 = vmatpush.bf16.msra.mxu0 0
      %1003 = vmatpush.bf16.msra.mxu0 0
      %1004 = vmatpush.bf16.msra.mxu0 %v995
      %1005 = vmatmul.bf16.gmra.mxu0 %v712
      %v1006 = vpop.f32.mrf.mxu0
      %v1007 = vadd.f32 0.0, %v1006
      %v1008 = vpop.f32.mrf.mxu0
      %v1009 = vadd.f32 0.0, %v1008
      %1010 = vmatmul.bf16.gmra.mxu0 %v715
      %v1011 = vpop.f32.mrf.mxu0
      %v1012 = vadd.f32 0.0, %v1011
      %v1013 = vpop.f32.mrf.mxu0
      %v1014 = vadd.f32 0.0, %v1013
      %1015 = vmatmul.bf16.gmra.mxu0 %v718
      %v1016 = vpop.f32.mrf.mxu0
      %v1017 = vadd.f32 0.0, %v1016
      %v1018 = vpop.f32.mrf.mxu0
      %v1019 = vadd.f32 0.0, %v1018
      %1020 = vmatmul.bf16.gmra.mxu0 %v721
      %v1021 = vpop.f32.mrf.mxu0
      %v1022 = vadd.f32 0.0, %v1021
      %v1023 = vpop.f32.mrf.mxu0
      %v1024 = vadd.f32 0.0, %v1023
      %1025 = vmatmul.bf16.gmra.mxu0 %v724
      %v1026 = vpop.f32.mrf.mxu0
      %v1027 = vadd.f32 0.0, %v1026
      %v1028 = vpop.f32.mrf.mxu0
      %v1029 = vadd.f32 0.0, %v1028
      %1030 = vmatmul.bf16.gmra.mxu0 %v727
      %v1031 = vpop.f32.mrf.mxu0
      %v1032 = vadd.f32 0.0, %v1031
      %v1033 = vpop.f32.mrf.mxu0
      %v1034 = vadd.f32 0.0, %v1033
      %1035 = vmatmul.bf16.gmra.mxu0 %v730
      %v1036 = vpop.f32.mrf.mxu0
      %v1037 = vadd.f32 0.0, %v1036
      %v1038 = vpop.f32.mrf.mxu0
      %v1039 = vadd.f32 0.0, %v1038
      %1040 = vmatmul.bf16.gmra.mxu0 %v992
      %v1041 = vpop.f32.mrf.mxu0
      %v1042 = vadd.f32 0.0, %v1041
      %v1043 = vpop.f32.mrf.mxu0
      %v1044 = vadd.f32 0.0, %v1043
      %1045 = vdwg.mxu0
      %v1046 = vadd.f32 %v962, %v1007
      %v1047 = vadd.f32 %v963, %v1009
      %v1048 = vadd.f32 %v964, %v1012
      %v1049 = vadd.f32 %v965, %v1014
      %v1050 = vadd.f32 %v966, %v1017
      %v1051 = vadd.f32 %v967, %v1019
      %v1052 = vadd.f32 %v968, %v1022
      %v1053 = vadd.f32 %v969, %v1024
      %v1054 = vadd.f32 %v970, %v1027
      %v1055 = vadd.f32 %v971, %v1029
      %v1056 = vadd.f32 %v972, %v1032
      %v1057 = vadd.f32 %v973, %v1034
      %v1058 = vadd.f32 %v974, %v1037
      %v1059 = vadd.f32 %v975, %v1039
      %v1060 = vadd.f32 %v976, %v1042
      %v1061 = vadd.f32 %v977, %v1044
      %s1062 = scalar_lea.vmem %s1, 12
      %v1063 = vld [vmem:[%s1062] sm:$0x3]
      %v1066 = vunpack.c.l.b16 %v196
      %v1067 = vunpack.c.l.b16 %v197
      %v1068 = vpack.c.b16 %v1067, %v1066
      %v1070 = vsel %vm421, %v1068, 0
      %v1073 = vsel %vm446, %v1063, 0
      %1075 = vmatpush.bf16.msra.mxu0 0
      %1076 = vmatpush.bf16.msra.mxu0 0
      %1077 = vmatpush.bf16.msra.mxu0 0
      %1078 = vmatpush.bf16.msra.mxu0 0
      %1079 = vmatpush.bf16.msra.mxu0 0
      %1080 = vmatpush.bf16.msra.mxu0 0
      %1081 = vmatpush.bf16.msra.mxu0 0
      %1082 = vmatpush.bf16.msra.mxu0 %v1073
      %1083 = vmatmul.bf16.gmra.mxu0 %v546
      %v1084 = vpop.f32.mrf.mxu0
      %v1085 = vadd.f32 0.0, %v1084
      %v1086 = vpop.f32.mrf.mxu0
      %v1087 = vadd.f32 0.0, %v1086
      %1088 = vmatmul.bf16.gmra.mxu0 %v549
      %v1089 = vpop.f32.mrf.mxu0
      %v1090 = vadd.f32 0.0, %v1089
      %v1091 = vpop.f32.mrf.mxu0
      %v1092 = vadd.f32 0.0, %v1091
      %1093 = vmatmul.bf16.gmra.mxu0 %v552
      %v1094 = vpop.f32.mrf.mxu0
      %v1095 = vadd.f32 0.0, %v1094
      %v1096 = vpop.f32.mrf.mxu0
      %v1097 = vadd.f32 0.0, %v1096
      %1098 = vmatmul.bf16.gmra.mxu0 %v555
      %v1099 = vpop.f32.mrf.mxu0
      %v1100 = vadd.f32 0.0, %v1099
      %v1101 = vpop.f32.mrf.mxu0
      %v1102 = vadd.f32 0.0, %v1101
      %1103 = vmatmul.bf16.gmra.mxu0 %v558
      %v1104 = vpop.f32.mrf.mxu0
      %v1105 = vadd.f32 0.0, %v1104
      %v1106 = vpop.f32.mrf.mxu0
      %v1107 = vadd.f32 0.0, %v1106
      %1108 = vmatmul.bf16.gmra.mxu0 %v561
      %v1109 = vpop.f32.mrf.mxu0
      %v1110 = vadd.f32 0.0, %v1109
      %v1111 = vpop.f32.mrf.mxu0
      %v1112 = vadd.f32 0.0, %v1111
      %1113 = vmatmul.bf16.gmra.mxu0 %v808
      %v1114 = vpop.f32.mrf.mxu0
      %v1115 = vadd.f32 0.0, %v1114
      %v1116 = vpop.f32.mrf.mxu0
      %v1117 = vadd.f32 0.0, %v1116
      %1118 = vmatmul.bf16.gmra.mxu0 %v1070
      %v1119 = vpop.f32.mrf.mxu0
      %v1120 = vadd.f32 0.0, %v1119
      %v1121 = vpop.f32.mrf.mxu0
      %v1122 = vadd.f32 0.0, %v1121
      %1123 = vdwg.mxu0
      %v1124 = vadd.f32 %v1046, %v1085
      %v1125 = vadd.f32 %v1047, %v1087
      %v1126 = vadd.f32 %v1048, %v1090
      %v1127 = vadd.f32 %v1049, %v1092
      %v1128 = vadd.f32 %v1050, %v1095
      %v1129 = vadd.f32 %v1051, %v1097
      %v1130 = vadd.f32 %v1052, %v1100
      %v1131 = vadd.f32 %v1053, %v1102
      %v1132 = vadd.f32 %v1054, %v1105
      %v1133 = vadd.f32 %v1055, %v1107
      %v1134 = vadd.f32 %v1056, %v1110
      %v1135 = vadd.f32 %v1057, %v1112
      %v1136 = vadd.f32 %v1058, %v1115
      %v1137 = vadd.f32 %v1059, %v1117
      %v1138 = vadd.f32 %v1060, %v1120
      %v1139 = vadd.f32 %v1061, %v1122
      %v1141 = vshrl.u32 %v196, 16
      %v1143 = vrot.slane %v1141, 4
      %v1144 = vshll.u32 %v196, 16
      %v1146 = vrot.slane %v1144, 5
      %v1147 = vor.u32 %v1143, %v1146
      %v1148 = vrot.slane %v1147, 4
      %v1150 = vshll.u32 %v197, 16
      %v1152 = vrot.slane %v1150, 5
      %v1153 = vsel %vm202, %v1148, %v1152
      %v1154 = vshrl.u32 %v197, 16
      %v1156 = vrot.slane %v1154, 4
      %v1157 = vor.u32 %v1156, %v1152
      %v1158 = vrot.slane %v1157, 4
      %v1160 = vshll.u32 %v198, 16
      %v1162 = vrot.slane %v1160, 5
      %v1163 = vsel %vm202, %v1158, %v1162
      %s1164 = scalar_lea.vmem %s1, 14
      %v1165 = vld [vmem:[%s1164] sm:$0x3]
      %v1166 = vunpack.c.l.b16 %v1153
      %v1167 = vunpack.c.l.b16 %v1163
      %v1168 = vpack.c.b16 %v1167, %v1166
      %v1170 = vsel %vm421, %v1168, 0
      %v1173 = vsel %vm446, %v1165, 0
      %1175 = vmatpush.bf16.msra.mxu0 0
      %1176 = vmatpush.bf16.msra.mxu0 0
      %1177 = vmatpush.bf16.msra.mxu0 0
      %1178 = vmatpush.bf16.msra.mxu0 0
      %1179 = vmatpush.bf16.msra.mxu0 0
      %1180 = vmatpush.bf16.msra.mxu0 0
      %1181 = vmatpush.bf16.msra.mxu0 0
      %1182 = vmatpush.bf16.msra.mxu0 %v1173
      %1183 = vmatmul.bf16.gmra.mxu0 %v429
      %v1184 = vpop.f32.mrf.mxu0
      %v1185 = vadd.f32 0.0, %v1184
      %v1186 = vpop.f32.mrf.mxu0
      %v1187 = vadd.f32 0.0, %v1186
      %1188 = vmatmul.bf16.gmra.mxu0 %v432
      %v1189 = vpop.f32.mrf.mxu0
      %v1190 = vadd.f32 0.0, %v1189
      %v1191 = vpop.f32.mrf.mxu0
      %v1192 = vadd.f32 0.0, %v1191
      %1193 = vmatmul.bf16.gmra.mxu0 %v435
      %v1194 = vpop.f32.mrf.mxu0
      %v1195 = vadd.f32 0.0, %v1194
      %v1196 = vpop.f32.mrf.mxu0
      %v1197 = vadd.f32 0.0, %v1196
      %1198 = vmatmul.bf16.gmra.mxu0 %v438
      %v1199 = vpop.f32.mrf.mxu0
      %v1200 = vadd.f32 0.0, %v1199
      %v1201 = vpop.f32.mrf.mxu0
      %v1202 = vadd.f32 0.0, %v1201
      %1203 = vmatmul.bf16.gmra.mxu0 %v441
      %v1204 = vpop.f32.mrf.mxu0
      %v1205 = vadd.f32 0.0, %v1204
      %v1206 = vpop.f32.mrf.mxu0
      %v1207 = vadd.f32 0.0, %v1206
      %1208 = vmatmul.bf16.gmra.mxu0 %v444
      %v1209 = vpop.f32.mrf.mxu0
      %v1210 = vadd.f32 0.0, %v1209
      %v1211 = vpop.f32.mrf.mxu0
      %v1212 = vadd.f32 0.0, %v1211
      %1213 = vmatmul.bf16.gmra.mxu0 %v908
      %v1214 = vpop.f32.mrf.mxu0
      %v1215 = vadd.f32 0.0, %v1214
      %v1216 = vpop.f32.mrf.mxu0
      %v1217 = vadd.f32 0.0, %v1216
      %1218 = vmatmul.bf16.gmra.mxu0 %v1170
      %v1219 = vpop.f32.mrf.mxu0
      %v1220 = vadd.f32 0.0, %v1219
      %v1221 = vpop.f32.mrf.mxu0
      %v1222 = vadd.f32 0.0, %v1221
      %1223 = vdwg.mxu0
      %v1224 = vadd.f32 %v1124, %v1185
      %v1225 = vadd.f32 %v1125, %v1187
      %v1226 = vadd.f32 %v1126, %v1190
      %v1227 = vadd.f32 %v1127, %v1192
      %v1228 = vadd.f32 %v1128, %v1195
      %v1229 = vadd.f32 %v1129, %v1197
      %v1230 = vadd.f32 %v1130, %v1200
      %v1231 = vadd.f32 %v1131, %v1202
      %v1232 = vadd.f32 %v1132, %v1205
      %v1233 = vadd.f32 %v1133, %v1207
      %v1234 = vadd.f32 %v1134, %v1210
      %v1235 = vadd.f32 %v1135, %v1212
      %v1236 = vadd.f32 %v1136, %v1215
      %v1237 = vadd.f32 %v1137, %v1217
      %v1238 = vadd.f32 %v1138, %v1220
      %v1239 = vadd.f32 %v1139, %v1222
      %v1241 = vrot.slane %v196, 5
      %v1242 = vrot.slane %v1241, 4
      %v1243 = vrot.slane %v197, 5
      %v1244 = vsel %vm625, %v1242, %v1243
      %v1245 = vrot.slane %v1243, 4
      %v1246 = vrot.slane %v198, 5
      %v1247 = vsel %vm625, %v1245, %v1246
      %s1248 = scalar_lea.vmem %s1, 16
      %v1249 = vld [vmem:[%s1248] sm:$0x3]
      %v1250 = vunpack.c.l.b16 %v1244
      %v1251 = vunpack.c.l.b16 %v1247
      %v1252 = vpack.c.b16 %v1251, %v1250
      %v1254 = vsel %vm421, %v1252, 0
      %v1257 = vsel %vm446, %v1249, 0
      %1259 = vmatpush.bf16.msra.mxu0 0
      %1260 = vmatpush.bf16.msra.mxu0 0
      %1261 = vmatpush.bf16.msra.mxu0 0
      %1262 = vmatpush.bf16.msra.mxu0 0
      %1263 = vmatpush.bf16.msra.mxu0 0
      %1264 = vmatpush.bf16.msra.mxu0 0
      %1265 = vmatpush.bf16.msra.mxu0 0
      %1266 = vmatpush.bf16.msra.mxu0 %v1257
      %1267 = vmatmul.bf16.gmra.mxu0 %v715
      %v1268 = vpop.f32.mrf.mxu0
      %v1269 = vadd.f32 0.0, %v1268
      %v1270 = vpop.f32.mrf.mxu0
      %v1271 = vadd.f32 0.0, %v1270
      %1272 = vmatmul.bf16.gmra.mxu0 %v718
      %v1273 = vpop.f32.mrf.mxu0
      %v1274 = vadd.f32 0.0, %v1273
      %v1275 = vpop.f32.mrf.mxu0
      %v1276 = vadd.f32 0.0, %v1275
      %1277 = vmatmul.bf16.gmra.mxu0 %v721
      %v1278 = vpop.f32.mrf.mxu0
      %v1279 = vadd.f32 0.0, %v1278
      %v1280 = vpop.f32.mrf.mxu0
      %v1281 = vadd.f32 0.0, %v1280
      %1282 = vmatmul.bf16.gmra.mxu0 %v724
      %v1283 = vpop.f32.mrf.mxu0
      %v1284 = vadd.f32 0.0, %v1283
      %v1285 = vpop.f32.mrf.mxu0
      %v1286 = vadd.f32 0.0, %v1285
      %1287 = vmatmul.bf16.gmra.mxu0 %v727
      %v1288 = vpop.f32.mrf.mxu0
      %v1289 = vadd.f32 0.0, %v1288
      %v1290 = vpop.f32.mrf.mxu0
      %v1291 = vadd.f32 0.0, %v1290
      %1292 = vmatmul.bf16.gmra.mxu0 %v730
      %v1293 = vpop.f32.mrf.mxu0
      %v1294 = vadd.f32 0.0, %v1293
      %v1295 = vpop.f32.mrf.mxu0
      %v1296 = vadd.f32 0.0, %v1295
      %1297 = vmatmul.bf16.gmra.mxu0 %v992
      %v1298 = vpop.f32.mrf.mxu0
      %v1299 = vadd.f32 0.0, %v1298
      %v1300 = vpop.f32.mrf.mxu0
      %v1301 = vadd.f32 0.0, %v1300
      %1302 = vmatmul.bf16.gmra.mxu0 %v1254
      %v1303 = vpop.f32.mrf.mxu0
      %v1304 = vadd.f32 0.0, %v1303
      %v1305 = vpop.f32.mrf.mxu0
      %v1306 = vadd.f32 0.0, %v1305
      %1307 = vdwg.mxu0
      %v1308 = vadd.f32 %v1224, %v1269
      %v1309 = vadd.f32 %v1225, %v1271
      %v1310 = vadd.f32 %v1226, %v1274
      %v1311 = vadd.f32 %v1227, %v1276
      %v1312 = vadd.f32 %v1228, %v1279
      %v1313 = vadd.f32 %v1229, %v1281
      %v1314 = vadd.f32 %v1230, %v1284
      %v1315 = vadd.f32 %v1231, %v1286
      %v1316 = vadd.f32 %v1232, %v1289
      %v1317 = vadd.f32 %v1233, %v1291
      %v1318 = vadd.f32 %v1234, %v1294
      %v1319 = vadd.f32 %v1235, %v1296
      %v1320 = vadd.f32 %v1236, %v1299
      %v1321 = vadd.f32 %v1237, %v1301
      %v1322 = vadd.f32 %v1238, %v1304
      %v1323 = vadd.f32 %v1239, %v1306
      %v1324 = vadd.f32 %v1308, %v1309
      %v1325 = vadd.f32 %v1324, %v1310
      %v1326 = vadd.f32 %v1325, %v1311
      %v1327 = vadd.f32 %v1326, %v1312
      %v1328 = vadd.f32 %v1327, %v1313
      %v1329 = vadd.f32 %v1328, %v1314
      %v1330 = vadd.f32 %v1329, %v1315
      %v1331 = vadd.f32 %v1330, %v1316
      %v1332 = vadd.f32 %v1331, %v1317
      %v1333 = vadd.f32 %v1332, %v1318
      %v1334 = vadd.f32 %v1333, %v1319
      %v1335 = vadd.f32 %v1334, %v1320
      %v1336 = vadd.f32 %v1335, %v1321
      %v1337 = vadd.f32 %v1336, %v1322
      %v1338 = vadd.f32 %v1337, %v1323
      %v1339 = vrot.slane %v1338, 4
      %v1340 = vadd.f32 %v1338, %v1339
      %v1341 = vrot.slane %v1340, 2
      %v1342 = vadd.f32 %v1340, %v1341
      %v1343 = vrot.slane %v1342, 1
      %v1344 = vadd.f32 %v1342, %v1343
      %1345 = vst [vmem:[%s163] sm:$0x1] %v1344
      %v1346 = vmul.f32 %v1308, %v1308
      %v1347 = vmul.f32 %v1309, %v1309
      %v1348 = vmul.f32 %v1310, %v1310
      %v1349 = vmul.f32 %v1311, %v1311
      %v1350 = vmul.f32 %v1312, %v1312
      %v1351 = vmul.f32 %v1313, %v1313
      %v1352 = vmul.f32 %v1314, %v1314
      %v1353 = vmul.f32 %v1315, %v1315
      %v1354 = vmul.f32 %v1316, %v1316
      %v1355 = vmul.f32 %v1317, %v1317
      %v1356 = vmul.f32 %v1318, %v1318
      %v1357 = vmul.f32 %v1319, %v1319
      %v1358 = vmul.f32 %v1320, %v1320
      %v1359 = vmul.f32 %v1321, %v1321
      %v1360 = vmul.f32 %v1322, %v1322
      %v1361 = vmul.f32 %v1323, %v1323
      %v1362 = vadd.f32 %v1346, %v1347
      %v1363 = vadd.f32 %v1362, %v1348
      %v1364 = vadd.f32 %v1363, %v1349
      %v1365 = vadd.f32 %v1364, %v1350
      %v1366 = vadd.f32 %v1365, %v1351
      %v1367 = vadd.f32 %v1366, %v1352
      %v1368 = vadd.f32 %v1367, %v1353
      %v1369 = vadd.f32 %v1368, %v1354
      %v1370 = vadd.f32 %v1369, %v1355
      %v1371 = vadd.f32 %v1370, %v1356
      %v1372 = vadd.f32 %v1371, %v1357
      %v1373 = vadd.f32 %v1372, %v1358
      %v1374 = vadd.f32 %v1373, %v1359
      %v1375 = vadd.f32 %v1374, %v1360
      %v1376 = vadd.f32 %v1375, %v1361
      %v1377 = vrot.slane %v1376, 4
      %v1378 = vadd.f32 %v1376, %v1377
      %v1379 = vrot.slane %v1378, 2
      %v1380 = vadd.f32 %v1378, %v1379
      %v1381 = vrot.slane %v1380, 1
      %v1382 = vadd.f32 %v1380, %v1381
      %1383 = vst [vmem:[%s163 + $0x1] sm:$0x1] %v1382
      %p1384 = scmp.lt.s32.totalorder %s17, 1
      %s1385 = scalar_select %p1384, %s17, 1
      %p1386 = scmp.lt.s32.totalorder %s18, 1
      %s1387 = scalar_select %p1386, %s18, 1
      %s1388 = smul.addr %s1385, 2
      %s1389 = sadd.s32 %s1387, %s1388
      %s1390 = smul.addr %s1389, 2
      %s1391 = scalar_lea.vmem %s2, %s1390
      // Predicated region
      $region29: #{basic_conv_block.2} parent=27 // pred_check
        %p1392 = pneg %p92
      $region30: #{basic_conv_block.2} parent=27 // pred_check_branch
        %1394 = sbr.rel (%p1392) target = $region32
      $region31: #{basic_conv_block.2} parent=27 // pred_region
        _
      $region32: #{basic_conv_block.2} parent=27 // pred_fallthru
        _
    $region28: #{basic_conv_block.2} parent=5 // pred_fallthru
      _
    %p1395 = scmp.le.s32.totalorder 2, %s8
    // Predicated region
    $region33: #{basic_conv_block.2} parent=5 // pred_check
      %p1396 = pneg %p1395
    $region34: #{basic_conv_block.2} parent=5 // pred_check_branch
      %1398 = sbr.rel (%p1396) target = $region36
    $region35: #{basic_conv_block.2} parent=5 // pred_region
      %s1399 = ssub.s32 %s8, 2
      // Predicated region
      $region37: #{basic_conv_block.2} parent=35 // pred_check
        %p1400 = pneg %p98
      $region38: #{basic_conv_block.2} parent=35 // pred_check_branch
        %1402 = sbr.rel (%p1400) target = $region40
      $region39: #{basic_conv_block.2} parent=35 // pred_region
        %p1403 = scmp.lt.s32.totalorder %s19, 1
        %s1404 = scalar_select %p1403, %s19, 1
        %p1405 = scmp.lt.s32.totalorder %s20, 1
        %s1406 = scalar_select %p1405, %s20, 1
        %s1407 = smul.addr %s1404, 2
        %s1408 = sadd.s32 %s1406, %s1407
        %s1409 = smul.addr %s1408, 2
        %s1410 = scalar_lea.vmem %s2, %s1409
      $region40: #{basic_conv_block.2} parent=35 // pred_fallthru
        _
    $region36: #{basic_conv_block.2} parent=5 // pred_fallthru
      _
  $region6: #{basic_conv_block.2} parent=0 // loop_footer
    %s12 = sadd.s32 1, %s8
  $region7: #{basic_conv_block.2} parent=0 // loop_footer_branch
    %7 = sbr.rel target = $region3
  $region8: #{basic_conv_block.2} parent=0 // loop_exit
    _

// kernel: basic_conv_block.3
$region0: #{basic_conv_block.3}
  #allocation0 [shape = 'u32[]', space=smem, size = 0x4, offset = 0x4, fixed_abs, tag = 'smem constant byte address 0x4 - core index']
  #allocation1 [shape = 'u32[72,128]{1,0:T(1,128)}', space=vmem, size = 0x9000, scoped, tag = 'internal scratch']
  %s0 = inlined_call_operand.vmem [shape: bf16[2,18,18,4], index: 0, kind: input, shape index: {}]
  %s1 = inlined_call_operand.vmem [shape: bf16[9,4,128], index: 1, kind: input, shape index: {}]
  %s2 = inlined_call_operand.vmem [shape: f32[2,128], index: 2, kind: input, shape index: {}]
  %s3 = inlined_call_operand.vmem [shape: f32[2,256,128], index: 3, kind: output, shape index: {}]
  %s4 = sld [smem:[#allocation0]]
  $region45: #{basic_conv_block.3} parent=0
    _
  %s6 = ssub.s32 1, %s4
  %s7 = scalar_select 0, %s6, %s4
  loop: start=0, step=1, limit=6
  $region2: #{basic_conv_block.3} parent=0 // loop_pre_header
    _
  $region3: #{basic_conv_block.3} parent=0 // loop_header
    %s9 = sphi 0, %s13
    %p10 = scmp.ge.s32.totalorder %s9, 6
    %s16 = sphi 0, %s28
    %s17 = sphi 0, %s24
    %s18 = sphi 0, %s16
    %s19 = sphi 0, %s17
    %s20 = sphi 0, %s18
    %s21 = sphi 0, %s19
    %s31 = sphi 0, %s33
    %s34 = sphi 0, %s31
    %s35 = sphi 0, %s34
    %s51 = sphi 0, %s35
    %s55 = sphi 0, %s55
    %s57 = sphi 0, %s55
    %s58 = sphi 0, %s57
    %s72 = sphi 0, %s58
    %s76 = sphi 0, %s76
    %s78 = sphi 0, %s76
    %s79 = sphi 0, %s78
    %s93 = sphi 0, %s79
    %s101 = sphi 0, %s103
    %s104 = sphi 0, %s101
    %s105 = sphi 0, %s104
    %s121 = sphi 0, %s105
  $region4: #{basic_conv_block.3} parent=0 // loop_header_branch
    %12 = sbr.rel (%p10) target = $region8
  $region5: #{basic_conv_block.3} parent=0 // loop_body
    %s14 = ssub.s32 %s9, 1
    %s15 = ssub.s32 %s9, 2
    %s22 = sadd.s32 1, %s17
    %p23 = scmp.ge.s32.totalorder %s22, 2
    %s24 = scalar_select %p23, 0, %s22
    %s25 = sadd.s32 1, %s16
    %s26 = scalar_select %p23, %s25, %s16
    %p27 = scmp.ge.s32.totalorder %s26, 2
    %s28 = scalar_select %p27, 0, %s26
    %s29 = ssub.s32 %s16, %s28
    %p30 = scmp.eq.s32.totalorder %s29, 0
    %s32 = sadd.s32 %s31, 1
    %s33 = scalar_select %p30, %s31, %s32
    %p36 = pneg %p30
    %p37 = scmp.eq.s32.totalorder %s9, 3
    %p38 = por %p36, %p37
    %p39 = scmp.ne.s32.totalorder %s31, %s34
    %p40 = scmp.eq.s32.totalorder %s9, 0
    %p41 = por %p39, %p40
    %p42 = scmp.ne.s32.totalorder %s31, %s34
    %p43 = scmp.eq.s32.totalorder %s14, 3
    %p44 = por %p42, %p43
    %p45 = scmp.ne.s32.totalorder %s34, %s35
    %p46 = scmp.eq.s32.totalorder %s14, 0
    %p47 = por %p45, %p46
    %p48 = scmp.ne.s32.totalorder %s34, %s35
    %p49 = scmp.eq.s32.totalorder %s15, 3
    %p50 = por %p48, %p49
    %p52 = scmp.ne.s32.totalorder %s35, %s51
    %p53 = scmp.eq.s32.totalorder %s15, 0
    %p54 = por %p52, %p53
    %s56 = sadd.s32 %s55, 1
    %p59 = scmp.eq.s32.totalorder %s9, 3
    %p60 = scmp.ne.s32.totalorder %s55, %s57
    %p61 = scmp.eq.s32.totalorder %s9, 0
    %p62 = por %p60, %p61
    %p63 = scmp.ne.s32.totalorder %s55, %s57
    %p64 = scmp.eq.s32.totalorder %s14, 3
    %p65 = por %p63, %p64
    %p66 = scmp.ne.s32.totalorder %s57, %s58
    %p67 = scmp.eq.s32.totalorder %s14, 0
    %p68 = por %p66, %p67
    %p69 = scmp.ne.s32.totalorder %s57, %s58
    %p70 = scmp.eq.s32.totalorder %s15, 3
    %p71 = por %p69, %p70
    %p73 = scmp.ne.s32.totalorder %s58, %s72
    %p74 = scmp.eq.s32.totalorder %s15, 0
    %p75 = por %p73, %p74
    %s77 = sadd.s32 %s76, 1
    %p80 = scmp.eq.s32.totalorder %s9, 3
    %p81 = scmp.ne.s32.totalorder %s76, %s78
    %p82 = scmp.eq.s32.totalorder %s9, 0
    %p83 = por %p81, %p82
    %p84 = scmp.ne.s32.totalorder %s76, %s78
    %p85 = scmp.eq.s32.totalorder %s14, 3
    %p86 = por %p84, %p85
    %p87 = scmp.ne.s32.totalorder %s78, %s79
    %p88 = scmp.eq.s32.totalorder %s14, 0
    %p89 = por %p87, %p88
    %p90 = scmp.ne.s32.totalorder %s78, %s79
    %p91 = scmp.eq.s32.totalorder %s15, 3
    %p92 = por %p90, %p91
    %p94 = scmp.ne.s32.totalorder %s79, %s93
    %p95 = scmp.eq.s32.totalorder %s15, 0
    %p96 = por %p94, %p95
    %s97 = ssub.s32 %s16, %s28
    %s98 = ssub.s32 %s17, %s24
    %s99 = sor.u32 %s97, %s98
    %p100 = scmp.eq.s32.totalorder %s99, 0
    %s102 = sadd.s32 %s101, 1
    %s103 = scalar_select %p100, %s101, %s102
    %p106 = pneg %p100
    %p107 = scmp.eq.s32.totalorder %s9, 3
    %p108 = por %p106, %p107
    %p109 = scmp.ne.s32.totalorder %s101, %s104
    %p110 = scmp.eq.s32.totalorder %s9, 0
    %p111 = por %p109, %p110
    %p112 = scmp.ne.s32.totalorder %s101, %s104
    %p113 = scmp.eq.s32.totalorder %s14, 3
    %p114 = por %p112, %p113
    %p115 = scmp.ne.s32.totalorder %s104, %s105
    %p116 = scmp.eq.s32.totalorder %s14, 0
    %p117 = por %p115, %p116
    %p118 = scmp.ne.s32.totalorder %s104, %s105
    %p119 = scmp.eq.s32.totalorder %s15, 3
    %p120 = por %p118, %p119
    %p122 = scmp.ne.s32.totalorder %s105, %s121
    %p123 = scmp.eq.s32.totalorder %s15, 0
    %p124 = por %p122, %p123
    %p125 = scmp.le.s32.totalorder 1, %s9
    %p126 = scmp.lt.s32.totalorder %s9, 5
    %p127 = pnand %p125, %p126
    %p128 = pneg %p127
    // Predicated region
    $region9: #{basic_conv_block.3} parent=5 // pred_check
      _
    $region10: #{basic_conv_block.3} parent=5 // pred_check_branch
      %130 = sbr.rel (%p127) target = $region12
    $region11: #{basic_conv_block.3} parent=5 // pred_region
      %s131 = ssub.s32 %s9, 1
      // Predicated region
      $region13: #{basic_conv_block.3} parent=11 // pred_check
        %p132 = pneg %p68
      $region14: #{basic_conv_block.3} parent=11 // pred_check_branch
        %134 = sbr.rel (%p132) target = $region16
      $region15: #{basic_conv_block.3} parent=11 // pred_region
        _
      $region16: #{basic_conv_block.3} parent=11 // pred_fallthru
        _
      // Predicated region
      $region17: #{basic_conv_block.3} parent=11 // pred_check
        %p135 = pneg %p89
      $region18: #{basic_conv_block.3} parent=11 // pred_check_branch
        %137 = sbr.rel (%p135) target = $region20
      $region19: #{basic_conv_block.3} parent=11 // pred_region
        _
      $region20: #{basic_conv_block.3} parent=11 // pred_fallthru
        _
    $region12: #{basic_conv_block.3} parent=5 // pred_fallthru
      _
    %p138 = scmp.lt.s32.totalorder %s9, 4
    // Predicated region
    $region21: #{basic_conv_block.3} parent=5 // pred_check
      %p139 = pneg %p138
    $region22: #{basic_conv_block.3} parent=5 // pred_check_branch
      %141 = sbr.rel (%p139) target = $region24
    $region23: #{basic_conv_block.3} parent=5 // pred_region
      // Predicated region
      $region25: #{basic_conv_block.3} parent=23 // pred_check
        %p142 = pneg %p41
      $region26: #{basic_conv_block.3} parent=23 // pred_check_branch
        %144 = sbr.rel (%p142) target = $region28
      $region27: #{basic_conv_block.3} parent=23 // pred_region
        %p145 = scmp.lt.s32.totalorder %s16, 1
        %s146 = scalar_select %p145, %s16, 1
        %s147 = smul.addr %s146, 54
        %s148 = smul.addr %s147, 4
        %s149 = scalar_lea.vmem %s0, %s148
      $region28: #{basic_conv_block.3} parent=23 // pred_fallthru
        _
    $region24: #{basic_conv_block.3} parent=5 // pred_fallthru
      _
    %p150 = scmp.le.s32.totalorder 1, %s9
    %p151 = scmp.lt.s32.totalorder %s9, 5
    %p152 = pnand %p150, %p151
    %p153 = pneg %p152
    // Predicated region
    $region29: #{basic_conv_block.3} parent=5 // pred_check
      _
    $region30: #{basic_conv_block.3} parent=5 // pred_check_branch
      %155 = sbr.rel (%p152) target = $region32
    $region31: #{basic_conv_block.3} parent=5 // pred_region
      %s156 = ssub.s32 %s9, 1
      %p157 = scmp.lt.s32.totalorder %s18, 1
      %s158 = scalar_select %p157, %s18, 1
      %s159 = smul.addr %s158, 54
      %s160 = smul.addr %s159, 4
      %s161 = scalar_lea.vmem %s0, %s160
      %p162 = pneg %p47
      %p163 = pneg %p44
      %p164 = pneg %p68
      %p165 = pneg %p65
      %p166 = pneg %p89
      %p167 = pneg %p86
      %p168 = pneg %p117
      %p169 = pneg %p114
      %s170 = smul.u32 16, %s19
      %p171 = scmp.lt.s32.totalorder %s18, 1
      %s172 = scalar_select %p171, %s18, 1
      %p173 = scmp.lt.s32.totalorder %s170, 31
      %s174 = scalar_select %p173, %s170, 31
      %s175 = smul.addr %s172, 32
      %s176 = sadd.s32 %s174, %s175
      %s177 = smul.addr %s176, 8
      %s178 = scalar_lea.vmem %s3, %s177
      %p179 = scmp.lt.s32.totalorder %s18, 1
      %s180 = scalar_select %p179, %s18, 1
      %s181 = smul.addr %s180, 54
      %s182 = smul.addr %s181, 4
      %s183 = scalar_lea.vmem %s0, %s182
      %s184 = smul.u32 16, %s19
      %p185 = scmp.lt.s32.totalorder %s18, 1
      %s186 = scalar_select %p185, %s18, 1
      %p187 = scmp.lt.s32.totalorder %s184, 31
      %s188 = scalar_select %p187, %s184, 31
      %s189 = smul.addr %s186, 32
      %s190 = sadd.s32 %s188, %s189
      %s191 = smul.addr %s190, 8
      %s192 = scalar_lea.vmem %s3, %s191
      %s193 = smul.u32 16, %s19
      %s195 = smul.u32 %s19, 8
      %s196 = smul.u32 %s195, 3
      %s197 = smul.addr %s196, 4
      %s198 = scalar_lea.vmem %s183, %s197
      %v199 = vld [vmem:[%s198] sm:$0xf]
      %v200 = vld [vmem:[%s198 + $0x4] sm:$0xf]
      %v201 = vld [vmem:[%s198 + $0x8] sm:$0x1]
      %v202 = vld [vmem:[%s198 + $0xc] sm:$0xf]
      %v203 = vld [vmem:[%s198 + $0x10] sm:$0xf]
      %v204 = vld [vmem:[%s198 + $0x14] sm:$0x1]
      %v205 = vld [vmem:[%s198 + $0x18] sm:$0xf]
      %v206 = vld [vmem:[%s198 + $0x1c] sm:$0xf]
      %v207 = vld [vmem:[%s198 + $0x20] sm:$0x1]
      %v208 = vld [vmem:[%s198 + $0x24] sm:$0xf]
      %v209 = vld [vmem:[%s198 + $0x28] sm:$0xf]
      %v210 = vld [vmem:[%s198 + $0x2c] sm:$0x1]
      %v211 = vld [vmem:[%s198 + $0x30] sm:$0xf]
      %v212 = vld [vmem:[%s198 + $0x34] sm:$0xf]
      %v213 = vld [vmem:[%s198 + $0x38] sm:$0x1]
      %v214 = vld [vmem:[%s198 + $0x3c] sm:$0xf]
      %v215 = vld [vmem:[%s198 + $0x40] sm:$0xf]
      %v216 = vld [vmem:[%s198 + $0x44] sm:$0x1]
      %v217 = vld [vmem:[%s198 + $0x48] sm:$0xf]
      %v218 = vld [vmem:[%s198 + $0x4c] sm:$0xf]
      %v219 = vld [vmem:[%s198 + $0x50] sm:$0x1]
      %v220 = vld [vmem:[%s198 + $0x54] sm:$0xf]
      %v221 = vld [vmem:[%s198 + $0x58] sm:$0xf]
      %v222 = vld [vmem:[%s198 + $0x5c] sm:$0x1]
      %v223 = vld [vmem:[%s198 + $0x60] sm:$0xf]
      %v224 = vld [vmem:[%s198 + $0x64] sm:$0xf]
      %v225 = vld [vmem:[%s198 + $0x68] sm:$0x1]
      %v226 = vld [vmem:[%s198 + $0x6c] sm:$0xf]
      %v227 = vld [vmem:[%s198 + $0x70] sm:$0xf]
      %v228 = vld [vmem:[%s198 + $0x74] sm:$0x1]
      %v229 = vld [vmem:[%s1] sm:$0x3]
      %vm230 = vsmask.f32 3328
      %vm231 = vsmask.f32 7440
      %vm232 = vmor %vm230, %vm231
      %v234 = vshrl.u32 %v199, 16
      %v236 = vrot.slane %v234, 4
      %v237 = vshll.u32 %v199, 16
      %v239 = vrot.slane %v237, 5
      %v240 = vor.u32 %v236, %v239
      %v241 = vrot.slane %v240, 4
      %v243 = vshll.u32 %v200, 16
      %v245 = vrot.slane %v243, 5
      %v246 = vsel %vm232, %v241, %v245
      %v247 = vshrl.u32 %v200, 16
      %v249 = vrot.slane %v247, 4
      %v250 = vor.u32 %v249, %v245
      %v251 = vrot.slane %v250, 4
      %v253 = vshll.u32 %v201, 16
      %v255 = vrot.slane %v253, 5
      %v256 = vsel %vm232, %v251, %v255
      %v258 = vshrl.u32 %v202, 16
      %v260 = vrot.slane %v258, 4
      %v261 = vshll.u32 %v202, 16
      %v263 = vrot.slane %v261, 5
      %v264 = vor.u32 %v260, %v263
      %v265 = vrot.slane %v264, 4
      %v267 = vshll.u32 %v203, 16
      %v269 = vrot.slane %v267, 5
      %v270 = vsel %vm232, %v265, %v269
      %v271 = vshrl.u32 %v203, 16
      %v273 = vrot.slane %v271, 4
      %v274 = vor.u32 %v273, %v269
      %v275 = vrot.slane %v274, 4
      %v277 = vshll.u32 %v204, 16
      %v279 = vrot.slane %v277, 5
      %v280 = vsel %vm232, %v275, %v279
      %v282 = vshrl.u32 %v205, 16
      %v284 = vrot.slane %v282, 4
      %v285 = vshll.u32 %v205, 16
      %v287 = vrot.slane %v285, 5
      %v288 = vor.u32 %v284, %v287
      %v289 = vrot.slane %v288, 4
      %v291 = vshll.u32 %v206, 16
      %v293 = vrot.slane %v291, 5
      %v294 = vsel %vm232, %v289, %v293
      %v295 = vshrl.u32 %v206, 16
      %v297 = vrot.slane %v295, 4
      %v298 = vor.u32 %v297, %v293
      %v299 = vrot.slane %v298, 4
      %v301 = vshll.u32 %v207, 16
      %v303 = vrot.slane %v301, 5
      %v304 = vsel %vm232, %v299, %v303
      %v306 = vshrl.u32 %v208, 16
      %v308 = vrot.slane %v306, 4
      %v309 = vshll.u32 %v208, 16
      %v311 = vrot.slane %v309, 5
      %v312 = vor.u32 %v308, %v311
      %v313 = vrot.slane %v312, 4
      %v315 = vshll.u32 %v209, 16
      %v317 = vrot.slane %v315, 5
      %v318 = vsel %vm232, %v313, %v317
      %v319 = vshrl.u32 %v209, 16
      %v321 = vrot.slane %v319, 4
      %v322 = vor.u32 %v321, %v317
      %v323 = vrot.slane %v322, 4
      %v325 = vshll.u32 %v210, 16
      %v327 = vrot.slane %v325, 5
      %v328 = vsel %vm232, %v323, %v327
      %v330 = vshrl.u32 %v211, 16
      %v332 = vrot.slane %v330, 4
      %v333 = vshll.u32 %v211, 16
      %v335 = vrot.slane %v333, 5
      %v336 = vor.u32 %v332, %v335
      %v337 = vrot.slane %v336, 4
      %v339 = vshll.u32 %v212, 16
      %v341 = vrot.slane %v339, 5
      %v342 = vsel %vm232, %v337, %v341
      %v343 = vshrl.u32 %v212, 16
      %v345 = vrot.slane %v343, 4
      %v346 = vor.u32 %v345, %v341
      %v347 = vrot.slane %v346, 4
      %v349 = vshll.u32 %v213, 16
      %v351 = vrot.slane %v349, 5
      %v352 = vsel %vm232, %v347, %v351
      %v354 = vshrl.u32 %v214, 16
      %v356 = vrot.slane %v354, 4
      %v357 = vshll.u32 %v214, 16
      %v359 = vrot.slane %v357, 5
      %v360 = vor.u32 %v356, %v359
      %v361 = vrot.slane %v360, 4
      %v363 = vshll.u32 %v215, 16
      %v365 = vrot.slane %v363, 5
      %v366 = vsel %vm232, %v361, %v365
      %v367 = vshrl.u32 %v215, 16
      %v369 = vrot.slane %v367, 4
      %v370 = vor.u32 %v369, %v365
      %v371 = vrot.slane %v370, 4
      %v373 = vshll.u32 %v216, 16
      %v375 = vrot.slane %v373, 5
      %v376 = vsel %vm232, %v371, %v375
      %v378 = vshrl.u32 %v217, 16
      %v380 = vrot.slane %v378, 4
      %v381 = vshll.u32 %v217, 16
      %v383 = vrot.slane %v381, 5
      %v384 = vor.u32 %v380, %v383
      %v385 = vrot.slane %v384, 4
      %v387 = vshll.u32 %v218, 16
      %v389 = vrot.slane %v387, 5
      %v390 = vsel %vm232, %v385, %v389
      %v391 = vshrl.u32 %v218, 16
      %v393 = vrot.slane %v391, 4
      %v394 = vor.u32 %v393, %v389
      %v395 = vrot.slane %v394, 4
      %v397 = vshll.u32 %v219, 16
      %v399 = vrot.slane %v397, 5
      %v400 = vsel %vm232, %v395, %v399
      %v402 = vshrl.u32 %v220, 16
      %v404 = vrot.slane %v402, 4
      %v405 = vshll.u32 %v220, 16
      %v407 = vrot.slane %v405, 5
      %v408 = vor.u32 %v404, %v407
      %v409 = vrot.slane %v408, 4
      %v411 = vshll.u32 %v221, 16
      %v413 = vrot.slane %v411, 5
      %v414 = vsel %vm232, %v409, %v413
      %v415 = vshrl.u32 %v221, 16
      %v417 = vrot.slane %v415, 4
      %v418 = vor.u32 %v417, %v413
      %v419 = vrot.slane %v418, 4
      %v421 = vshll.u32 %v222, 16
      %v423 = vrot.slane %v421, 5
      %v424 = vsel %vm232, %v419, %v423
      %s425 = scalar_lea.vmem %s1, 2
      %v426 = vld [vmem:[%s425] sm:$0x3]
      %v427 = vunpack.c.l.b16 %v246
      %v428 = vunpack.c.l.b16 %v256
      %v429 = vunpack.c.l.b16 %v270
      %v430 = vunpack.c.l.b16 %v280
      %v431 = vunpack.c.l.b16 %v294
      %v432 = vunpack.c.l.b16 %v304
      %v433 = vunpack.c.l.b16 %v318
      %v434 = vunpack.c.l.b16 %v328
      %v435 = vunpack.c.l.b16 %v342
      %v436 = vunpack.c.l.b16 %v352
      %v437 = vunpack.c.l.b16 %v366
      %v438 = vunpack.c.l.b16 %v376
      %v439 = vunpack.c.l.b16 %v390
      %v440 = vunpack.c.l.b16 %v400
      %v441 = vunpack.c.l.b16 %v414
      %v442 = vunpack.c.l.b16 %v424
      %v443 = vpack.c.b16 %v428, %v427
      %v444 = vpack.c.b16 %v430, %v429
      %v445 = vpack.c.b16 %v432, %v431
      %v446 = vpack.c.b16 %v434, %v433
      %v447 = vpack.c.b16 %v436, %v435
      %v448 = vpack.c.b16 %v438, %v437
      %v449 = vpack.c.b16 %v440, %v439
      %v450 = vpack.c.b16 %v442, %v441
      %vm451 = vcmask 31744
      %v453 = vsel %vm451, %v443, 0
      %v456 = vsel %vm451, %v444, 0
      %v459 = vsel %vm451, %v445, 0
      %v462 = vsel %vm451, %v446, 0
      %v465 = vsel %vm451, %v447, 0
      %v468 = vsel %vm451, %v448, 0
      %v471 = vsel %vm451, %v449, 0
      %v474 = vsel %vm451, %v450, 0
      %vm476 = vcmask 1041408
      %v478 = vsel %vm476, %v426, 0
      %480 = vmatpush.bf16.msra.mxu0 0
      %481 = vmatpush.bf16.msra.mxu0 0
      %482 = vmatpush.bf16.msra.mxu0 0
      %483 = vmatpush.bf16.msra.mxu0 0
      %484 = vmatpush.bf16.msra.mxu0 0
      %485 = vmatpush.bf16.msra.mxu0 0
      %486 = vmatpush.bf16.msra.mxu0 0
      %487 = vmatpush.bf16.msra.mxu0 %v478
      %488 = vmatmul.bf16.gmra.mxu0 %v453
      %v489 = vpop.f32.mrf.mxu0
      %v490 = vadd.f32 0.0, %v489
      %v491 = vpop.f32.mrf.mxu0
      %v492 = vadd.f32 0.0, %v491
      %493 = vmatmul.bf16.gmra.mxu0 %v456
      %v494 = vpop.f32.mrf.mxu0
      %v495 = vadd.f32 0.0, %v494
      %v496 = vpop.f32.mrf.mxu0
      %v497 = vadd.f32 0.0, %v496
      %498 = vmatmul.bf16.gmra.mxu0 %v459
      %v499 = vpop.f32.mrf.mxu0
      %v500 = vadd.f32 0.0, %v499
      %v501 = vpop.f32.mrf.mxu0
      %v502 = vadd.f32 0.0, %v501
      %503 = vmatmul.bf16.gmra.mxu0 %v462
      %v504 = vpop.f32.mrf.mxu0
      %v505 = vadd.f32 0.0, %v504
      %v506 = vpop.f32.mrf.mxu0
      %v507 = vadd.f32 0.0, %v506
      %508 = vmatmul.bf16.gmra.mxu0 %v465
      %v509 = vpop.f32.mrf.mxu0
      %v510 = vadd.f32 0.0, %v509
      %v511 = vpop.f32.mrf.mxu0
      %v512 = vadd.f32 0.0, %v511
      %513 = vmatmul.bf16.gmra.mxu0 %v468
      %v514 = vpop.f32.mrf.mxu0
      %v515 = vadd.f32 0.0, %v514
      %v516 = vpop.f32.mrf.mxu0
      %v517 = vadd.f32 0.0, %v516
      %518 = vmatmul.bf16.gmra.mxu0 %v471
      %v519 = vpop.f32.mrf.mxu0
      %v520 = vadd.f32 0.0, %v519
      %v521 = vpop.f32.mrf.mxu0
      %v522 = vadd.f32 0.0, %v521
      %523 = vmatmul.bf16.gmra.mxu0 %v474
      %v524 = vpop.f32.mrf.mxu0
      %v525 = vadd.f32 0.0, %v524
      %v526 = vpop.f32.mrf.mxu0
      %v527 = vadd.f32 0.0, %v526
      %528 = vdwg.mxu0
      %v545 = vunpack.c.l.b16 %v199
      %v546 = vunpack.c.l.b16 %v200
      %v547 = vunpack.c.l.b16 %v202
      %v548 = vunpack.c.l.b16 %v203
      %v549 = vunpack.c.l.b16 %v205
      %v550 = vunpack.c.l.b16 %v206
      %v551 = vunpack.c.l.b16 %v208
      %v552 = vunpack.c.l.b16 %v209
      %v553 = vunpack.c.l.b16 %v211
      %v554 = vunpack.c.l.b16 %v212
      %v555 = vunpack.c.l.b16 %v214
      %v556 = vunpack.c.l.b16 %v215
      %v557 = vunpack.c.l.b16 %v217
      %v558 = vunpack.c.l.b16 %v218
      %v559 = vunpack.c.l.b16 %v220
      %v560 = vunpack.c.l.b16 %v221
      %v561 = vpack.c.b16 %v546, %v545
      %v562 = vpack.c.b16 %v548, %v547
      %v563 = vpack.c.b16 %v550, %v549
      %v564 = vpack.c.b16 %v552, %v551
      %v565 = vpack.c.b16 %v554, %v553
      %v566 = vpack.c.b16 %v556, %v555
      %v567 = vpack.c.b16 %v558, %v557
      %v568 = vpack.c.b16 %v560, %v559
      %v570 = vsel %vm451, %v561, 0
      %v573 = vsel %vm451, %v562, 0
      %v576 = vsel %vm451, %v563, 0
      %v579 = vsel %vm451, %v564, 0
      %v582 = vsel %vm451, %v565, 0
      %v585 = vsel %vm451, %v566, 0
      %v588 = vsel %vm451, %v567, 0
      %v591 = vsel %vm451, %v568, 0
      %v594 = vsel %vm476, %v229, 0
      %596 = vmatpush.bf16.msra.mxu0 0
      %597 = vmatpush.bf16.msra.mxu0 0
      %598 = vmatpush.bf16.msra.mxu0 0
      %599 = vmatpush.bf16.msra.mxu0 0
      %600 = vmatpush.bf16.msra.mxu0 0
      %601 = vmatpush.bf16.msra.mxu0 0
      %602 = vmatpush.bf16.msra.mxu0 0
      %603 = vmatpush.bf16.msra.mxu0 %v594
      %604 = vmatmul.bf16.gmra.mxu0 %v570
      %v605 = vpop.f32.mrf.mxu0
      %v606 = vadd.f32 %v490, %v605
      %v607 = vpop.f32.mrf.mxu0
      %v608 = vadd.f32 %v492, %v607
      %609 = vmatmul.bf16.gmra.mxu0 %v573
      %v610 = vpop.f32.mrf.mxu0
      %v611 = vadd.f32 %v495, %v610
      %v612 = vpop.f32.mrf.mxu0
      %v613 = vadd.f32 %v497, %v612
      %614 = vmatmul.bf16.gmra.mxu0 %v576
      %v615 = vpop.f32.mrf.mxu0
      %v616 = vadd.f32 %v500, %v615
      %v617 = vpop.f32.mrf.mxu0
      %v618 = vadd.f32 %v502, %v617
      %619 = vmatmul.bf16.gmra.mxu0 %v579
      %v620 = vpop.f32.mrf.mxu0
      %v621 = vadd.f32 %v505, %v620
      %v622 = vpop.f32.mrf.mxu0
      %v623 = vadd.f32 %v507, %v622
      %624 = vmatmul.bf16.gmra.mxu0 %v582
      %v625 = vpop.f32.mrf.mxu0
      %v626 = vadd.f32 %v510, %v625
      %v627 = vpop.f32.mrf.mxu0
      %v628 = vadd.f32 %v512, %v627
      %629 = vmatmul.bf16.gmra.mxu0 %v585
      %v630 = vpop.f32.mrf.mxu0
      %v631 = vadd.f32 %v515, %v630
      %v632 = vpop.f32.mrf.mxu0
      %v633 = vadd.f32 %v517, %v632
      %634 = vmatmul.bf16.gmra.mxu0 %v588
      %v635 = vpop.f32.mrf.mxu0
      %v636 = vadd.f32 %v520, %v635
      %v637 = vpop.f32.mrf.mxu0
      %v638 = vadd.f32 %v522, %v637
      %639 = vmatmul.bf16.gmra.mxu0 %v591
      %v640 = vpop.f32.mrf.mxu0
      %v641 = vadd.f32 %v525, %v640
      %v642 = vpop.f32.mrf.mxu0
      %v643 = vadd.f32 %v527, %v642
      %644 = vdwg.mxu0
      %vm653 = vcmask 1042432
      %vm654 = vcmask 1046532
      %vm655 = vmor %vm653, %vm654
      %v656 = vrot.slane %v199, 5
      %v657 = vrot.slane %v656, 4
      %v658 = vrot.slane %v200, 5
      %v659 = vsel %vm655, %v657, %v658
      %v660 = vrot.slane %v658, 4
      %v661 = vrot.slane %v201, 5
      %v662 = vsel %vm655, %v660, %v661
      %v663 = vrot.slane %v202, 5
      %v664 = vrot.slane %v663, 4
      %v665 = vrot.slane %v203, 5
      %v666 = vsel %vm655, %v664, %v665
      %v667 = vrot.slane %v665, 4
      %v668 = vrot.slane %v204, 5
      %v669 = vsel %vm655, %v667, %v668
      %v670 = vrot.slane %v205, 5
      %v671 = vrot.slane %v670, 4
      %v672 = vrot.slane %v206, 5
      %v673 = vsel %vm655, %v671, %v672
      %v674 = vrot.slane %v672, 4
      %v675 = vrot.slane %v207, 5
      %v676 = vsel %vm655, %v674, %v675
      %v677 = vrot.slane %v208, 5
      %v678 = vrot.slane %v677, 4
      %v679 = vrot.slane %v209, 5
      %v680 = vsel %vm655, %v678, %v679
      %v681 = vrot.slane %v679, 4
      %v682 = vrot.slane %v210, 5
      %v683 = vsel %vm655, %v681, %v682
      %v684 = vrot.slane %v211, 5
      %v685 = vrot.slane %v684, 4
      %v686 = vrot.slane %v212, 5
      %v687 = vsel %vm655, %v685, %v686
      %v688 = vrot.slane %v686, 4
      %v689 = vrot.slane %v213, 5
      %v690 = vsel %vm655, %v688, %v689
      %v691 = vrot.slane %v214, 5
      %v692 = vrot.slane %v691, 4
      %v693 = vrot.slane %v215, 5
      %v694 = vsel %vm655, %v692, %v693
      %v695 = vrot.slane %v693, 4
      %v696 = vrot.slane %v216, 5
      %v697 = vsel %vm655, %v695, %v696
      %v698 = vrot.slane %v217, 5
      %v699 = vrot.slane %v698, 4
      %v700 = vrot.slane %v218, 5
      %v701 = vsel %vm655, %v699, %v700
      %v702 = vrot.slane %v700, 4
      %v703 = vrot.slane %v219, 5
      %v704 = vsel %vm655, %v702, %v703
      %v705 = vrot.slane %v220, 5
      %v706 = vrot.slane %v705, 4
      %v707 = vrot.slane %v221, 5
      %v708 = vsel %vm655, %v706, %v707
      %v709 = vrot.slane %v707, 4
      %v710 = vrot.slane %v222, 5
      %v711 = vsel %vm655, %v709, %v710
      %s712 = scalar_lea.vmem %s1, 4
      %v713 = vld [vmem:[%s712] sm:$0x3]
      %v714 = vunpack.c.l.b16 %v659
      %v715 = vunpack.c.l.b16 %v662
      %v716 = vunpack.c.l.b16 %v666
      %v717 = vunpack.c.l.b16 %v669
      %v718 = vunpack.c.l.b16 %v673
      %v719 = vunpack.c.l.b16 %v676
      %v720 = vunpack.c.l.b16 %v680
      %v721 = vunpack.c.l.b16 %v683
      %v722 = vunpack.c.l.b16 %v687
      %v723 = vunpack.c.l.b16 %v690
      %v724 = vunpack.c.l.b16 %v694
      %v725 = vunpack.c.l.b16 %v697
      %v726 = vunpack.c.l.b16 %v701
      %v727 = vunpack.c.l.b16 %v704
      %v728 = vunpack.c.l.b16 %v708
      %v729 = vunpack.c.l.b16 %v711
      %v730 = vpack.c.b16 %v715, %v714
      %v731 = vpack.c.b16 %v717, %v716
      %v732 = vpack.c.b16 %v719, %v718
      %v733 = vpack.c.b16 %v721, %v720
      %v734 = vpack.c.b16 %v723, %v722
      %v735 = vpack.c.b16 %v725, %v724
      %v736 = vpack.c.b16 %v727, %v726
      %v737 = vpack.c.b16 %v729, %v728
      %v739 = vsel %vm451, %v730, 0
      %v742 = vsel %vm451, %v731, 0
      %v745 = vsel %vm451, %v732, 0
      %v748 = vsel %vm451, %v733, 0
      %v751 = vsel %vm451, %v734, 0
      %v754 = vsel %vm451, %v735, 0
      %v757 = vsel %vm451, %v736, 0
      %v760 = vsel %vm451, %v737, 0
      %v763 = vsel %vm476, %v713, 0
      %765 = vmatpush.bf16.msra.mxu0 0
      %766 = vmatpush.bf16.msra.mxu0 0
      %767 = vmatpush.bf16.msra.mxu0 0
      %768 = vmatpush.bf16.msra.mxu0 0
      %769 = vmatpush.bf16.msra.mxu0 0
      %770 = vmatpush.bf16.msra.mxu0 0
      %771 = vmatpush.bf16.msra.mxu0 0
      %772 = vmatpush.bf16.msra.mxu0 %v763
      %773 = vmatmul.bf16.gmra.mxu0 %v739
      %v774 = vpop.f32.mrf.mxu0
      %v775 = vadd.f32 0.0, %v774
      %v776 = vpop.f32.mrf.mxu0
      %v777 = vadd.f32 0.0, %v776
      %778 = vmatmul.bf16.gmra.mxu0 %v742
      %v779 = vpop.f32.mrf.mxu0
      %v780 = vadd.f32 0.0, %v779
      %v781 = vpop.f32.mrf.mxu0
      %v782 = vadd.f32 0.0, %v781
      %783 = vmatmul.bf16.gmra.mxu0 %v745
      %v784 = vpop.f32.mrf.mxu0
      %v785 = vadd.f32 0.0, %v784
      %v786 = vpop.f32.mrf.mxu0
      %v787 = vadd.f32 0.0, %v786
      %788 = vmatmul.bf16.gmra.mxu0 %v748
      %v789 = vpop.f32.mrf.mxu0
      %v790 = vadd.f32 0.0, %v789
      %v791 = vpop.f32.mrf.mxu0
      %v792 = vadd.f32 0.0, %v791
      %793 = vmatmul.bf16.gmra.mxu0 %v751
      %v794 = vpop.f32.mrf.mxu0
      %v795 = vadd.f32 0.0, %v794
      %v796 = vpop.f32.mrf.mxu0
      %v797 = vadd.f32 0.0, %v796
      %798 = vmatmul.bf16.gmra.mxu0 %v754
      %v799 = vpop.f32.mrf.mxu0
      %v800 = vadd.f32 0.0, %v799
      %v801 = vpop.f32.mrf.mxu0
      %v802 = vadd.f32 0.0, %v801
      %803 = vmatmul.bf16.gmra.mxu0 %v757
      %v804 = vpop.f32.mrf.mxu0
      %v805 = vadd.f32 0.0, %v804
      %v806 = vpop.f32.mrf.mxu0
      %v807 = vadd.f32 0.0, %v806
      %808 = vmatmul.bf16.gmra.mxu0 %v760
      %v809 = vpop.f32.mrf.mxu0
      %v810 = vadd.f32 0.0, %v809
      %v811 = vpop.f32.mrf.mxu0
      %v812 = vadd.f32 0.0, %v811
      %813 = vdwg.mxu0
      %v814 = vadd.f32 %v606, %v775
      %v815 = vadd.f32 %v608, %v777
      %v816 = vadd.f32 %v611, %v780
      %v817 = vadd.f32 %v613, %v782
      %v818 = vadd.f32 %v616, %v785
      %v819 = vadd.f32 %v618, %v787
      %v820 = vadd.f32 %v621, %v790
      %v821 = vadd.f32 %v623, %v792
      %v822 = vadd.f32 %v626, %v795
      %v823 = vadd.f32 %v628, %v797
      %v824 = vadd.f32 %v631, %v800
      %v825 = vadd.f32 %v633, %v802
      %v826 = vadd.f32 %v636, %v805
      %v827 = vadd.f32 %v638, %v807
      %v828 = vadd.f32 %v641, %v810
      %v829 = vadd.f32 %v643, %v812
      %s830 = scalar_lea.vmem %s1, 6
      %v831 = vld [vmem:[%s830] sm:$0x3]
      %v834 = vunpack.c.l.b16 %v223
      %v835 = vunpack.c.l.b16 %v224
      %v836 = vpack.c.b16 %v835, %v834
      %v838 = vsel %vm451, %v836, 0
      %v841 = vsel %vm476, %v831, 0
      %843 = vmatpush.bf16.msra.mxu0 0
      %844 = vmatpush.bf16.msra.mxu0 0
      %845 = vmatpush.bf16.msra.mxu0 0
      %846 = vmatpush.bf16.msra.mxu0 0
      %847 = vmatpush.bf16.msra.mxu0 0
      %848 = vmatpush.bf16.msra.mxu0 0
      %849 = vmatpush.bf16.msra.mxu0 0
      %850 = vmatpush.bf16.msra.mxu0 %v841
      %851 = vmatmul.bf16.gmra.mxu0 %v573
      %v852 = vpop.f32.mrf.mxu0
      %v853 = vadd.f32 0.0, %v852
      %v854 = vpop.f32.mrf.mxu0
      %v855 = vadd.f32 0.0, %v854
      %856 = vmatmul.bf16.gmra.mxu0 %v576
      %v857 = vpop.f32.mrf.mxu0
      %v858 = vadd.f32 0.0, %v857
      %v859 = vpop.f32.mrf.mxu0
      %v860 = vadd.f32 0.0, %v859
      %861 = vmatmul.bf16.gmra.mxu0 %v579
      %v862 = vpop.f32.mrf.mxu0
      %v863 = vadd.f32 0.0, %v862
      %v864 = vpop.f32.mrf.mxu0
      %v865 = vadd.f32 0.0, %v864
      %866 = vmatmul.bf16.gmra.mxu0 %v582
      %v867 = vpop.f32.mrf.mxu0
      %v868 = vadd.f32 0.0, %v867
      %v869 = vpop.f32.mrf.mxu0
      %v870 = vadd.f32 0.0, %v869
      %871 = vmatmul.bf16.gmra.mxu0 %v585
      %v872 = vpop.f32.mrf.mxu0
      %v873 = vadd.f32 0.0, %v872
      %v874 = vpop.f32.mrf.mxu0
      %v875 = vadd.f32 0.0, %v874
      %876 = vmatmul.bf16.gmra.mxu0 %v588
      %v877 = vpop.f32.mrf.mxu0
      %v878 = vadd.f32 0.0, %v877
      %v879 = vpop.f32.mrf.mxu0
      %v880 = vadd.f32 0.0, %v879
      %881 = vmatmul.bf16.gmra.mxu0 %v591
      %v882 = vpop.f32.mrf.mxu0
      %v883 = vadd.f32 0.0, %v882
      %v884 = vpop.f32.mrf.mxu0
      %v885 = vadd.f32 0.0, %v884
      %886 = vmatmul.bf16.gmra.mxu0 %v838
      %v887 = vpop.f32.mrf.mxu0
      %v888 = vadd.f32 0.0, %v887
      %v889 = vpop.f32.mrf.mxu0
      %v890 = vadd.f32 0.0, %v889
      %891 = vdwg.mxu0
      %v892 = vadd.f32 %v814, %v853
      %v893 = vadd.f32 %v815, %v855
      %v894 = vadd.f32 %v816, %v858
      %v895 = vadd.f32 %v817, %v860
      %v896 = vadd.f32 %v818, %v863
      %v897 = vadd.f32 %v819, %v865
      %v898 = vadd.f32 %v820, %v868
      %v899 = vadd.f32 %v821, %v870
      %v900 = vadd.f32 %v822, %v873
      %v901 = vadd.f32 %v823, %v875
      %v902 = vadd.f32 %v824, %v878
      %v903 = vadd.f32 %v825, %v880
      %v904 = vadd.f32 %v826, %v883
      %v905 = vadd.f32 %v827, %v885
      %v906 = vadd.f32 %v828, %v888
      %v907 = vadd.f32 %v829, %v890
      %v909 = vshrl.u32 %v223, 16
      %v911 = vrot.slane %v909, 4
      %v912 = vshll.u32 %v223, 16
      %v914 = vrot.slane %v912, 5
      %v915 = vor.u32 %v911, %v914
      %v916 = vrot.slane %v915, 4
      %v918 = vshll.u32 %v224, 16
      %v920 = vrot.slane %v918, 5
      %v921 = vsel %vm232, %v916, %v920
      %v922 = vshrl.u32 %v224, 16
      %v924 = vrot.slane %v922, 4
      %v925 = vor.u32 %v924, %v920
      %v926 = vrot.slane %v925, 4
      %v928 = vshll.u32 %v225, 16
      %v930 = vrot.slane %v928, 5
      %v931 = vsel %vm232, %v926, %v930
      %s932 = scalar_lea.vmem %s1, 8
      %v933 = vld [vmem:[%s932] sm:$0x3]
      %v934 = vunpack.c.l.b16 %v921
      %v935 = vunpack.c.l.b16 %v931
      %v936 = vpack.c.b16 %v935, %v934
      %v938 = vsel %vm451, %v936, 0
      %v941 = vsel %vm476, %v933, 0
      %943 = vmatpush.bf16.msra.mxu0 0
      %944 = vmatpush.bf16.msra.mxu0 0
      %945 = vmatpush.bf16.msra.mxu0 0
      %946 = vmatpush.bf16.msra.mxu0 0
      %947 = vmatpush.bf16.msra.mxu0 0
      %948 = vmatpush.bf16.msra.mxu0 0
      %949 = vmatpush.bf16.msra.mxu0 0
      %950 = vmatpush.bf16.msra.mxu0 %v941
      %951 = vmatmul.bf16.gmra.mxu0 %v456
      %v952 = vpop.f32.mrf.mxu0
      %v953 = vadd.f32 0.0, %v952
      %v954 = vpop.f32.mrf.mxu0
      %v955 = vadd.f32 0.0, %v954
      %956 = vmatmul.bf16.gmra.mxu0 %v459
      %v957 = vpop.f32.mrf.mxu0
      %v958 = vadd.f32 0.0, %v957
      %v959 = vpop.f32.mrf.mxu0
      %v960 = vadd.f32 0.0, %v959
      %961 = vmatmul.bf16.gmra.mxu0 %v462
      %v962 = vpop.f32.mrf.mxu0
      %v963 = vadd.f32 0.0, %v962
      %v964 = vpop.f32.mrf.mxu0
      %v965 = vadd.f32 0.0, %v964
      %966 = vmatmul.bf16.gmra.mxu0 %v465
      %v967 = vpop.f32.mrf.mxu0
      %v968 = vadd.f32 0.0, %v967
      %v969 = vpop.f32.mrf.mxu0
      %v970 = vadd.f32 0.0, %v969
      %971 = vmatmul.bf16.gmra.mxu0 %v468
      %v972 = vpop.f32.mrf.mxu0
      %v973 = vadd.f32 0.0, %v972
      %v974 = vpop.f32.mrf.mxu0
      %v975 = vadd.f32 0.0, %v974
      %976 = vmatmul.bf16.gmra.mxu0 %v471
      %v977 = vpop.f32.mrf.mxu0
      %v978 = vadd.f32 0.0, %v977
      %v979 = vpop.f32.mrf.mxu0
      %v980 = vadd.f32 0.0, %v979
      %981 = vmatmul.bf16.gmra.mxu0 %v474
      %v982 = vpop.f32.mrf.mxu0
      %v983 = vadd.f32 0.0, %v982
      %v984 = vpop.f32.mrf.mxu0
      %v985 = vadd.f32 0.0, %v984
      %986 = vmatmul.bf16.gmra.mxu0 %v938
      %v987 = vpop.f32.mrf.mxu0
      %v988 = vadd.f32 0.0, %v987
      %v989 = vpop.f32.mrf.mxu0
      %v990 = vadd.f32 0.0, %v989
      %991 = vdwg.mxu0
      %v992 = vadd.f32 %v892, %v953
      %v993 = vadd.f32 %v893, %v955
      %v994 = vadd.f32 %v894, %v958
      %v995 = vadd.f32 %v895, %v960
      %v996 = vadd.f32 %v896, %v963
      %v997 = vadd.f32 %v897, %v965
      %v998 = vadd.f32 %v898, %v968
      %v999 = vadd.f32 %v899, %v970
      %v1000 = vadd.f32 %v900, %v973
      %v1001 = vadd.f32 %v901, %v975
      %v1002 = vadd.f32 %v902, %v978
      %v1003 = vadd.f32 %v903, %v980
      %v1004 = vadd.f32 %v904, %v983
      %v1005 = vadd.f32 %v905, %v985
      %v1006 = vadd.f32 %v906, %v988
      %v1007 = vadd.f32 %v907, %v990
      %v1009 = vrot.slane %v223, 5
      %v1010 = vrot.slane %v1009, 4
      %v1011 = vrot.slane %v224, 5
      %v1012 = vsel %vm655, %v1010, %v1011
      %v1013 = vrot.slane %v1011, 4
      %v1014 = vrot.slane %v225, 5
      %v1015 = vsel %vm655, %v1013, %v1014
      %s1016 = scalar_lea.vmem %s1, 10
      %v1017 = vld [vmem:[%s1016] sm:$0x3]
      %v1018 = vunpack.c.l.b16 %v1012
      %v1019 = vunpack.c.l.b16 %v1015
      %v1020 = vpack.c.b16 %v1019, %v1018
      %v1022 = vsel %vm451, %v1020, 0
      %v1025 = vsel %vm476, %v1017, 0
      %1027 = vmatpush.bf16.msra.mxu0 0
      %1028 = vmatpush.bf16.msra.mxu0 0
      %1029 = vmatpush.bf16.msra.mxu0 0
      %1030 = vmatpush.bf16.msra.mxu0 0
      %1031 = vmatpush.bf16.msra.mxu0 0
      %1032 = vmatpush.bf16.msra.mxu0 0
      %1033 = vmatpush.bf16.msra.mxu0 0
      %1034 = vmatpush.bf16.msra.mxu0 %v1025
      %1035 = vmatmul.bf16.gmra.mxu0 %v742
      %v1036 = vpop.f32.mrf.mxu0
      %v1037 = vadd.f32 0.0, %v1036
      %v1038 = vpop.f32.mrf.mxu0
      %v1039 = vadd.f32 0.0, %v1038
      %1040 = vmatmul.bf16.gmra.mxu0 %v745
      %v1041 = vpop.f32.mrf.mxu0
      %v1042 = vadd.f32 0.0, %v1041
      %v1043 = vpop.f32.mrf.mxu0
      %v1044 = vadd.f32 0.0, %v1043
      %1045 = vmatmul.bf16.gmra.mxu0 %v748
      %v1046 = vpop.f32.mrf.mxu0
      %v1047 = vadd.f32 0.0, %v1046
      %v1048 = vpop.f32.mrf.mxu0
      %v1049 = vadd.f32 0.0, %v1048
      %1050 = vmatmul.bf16.gmra.mxu0 %v751
      %v1051 = vpop.f32.mrf.mxu0
      %v1052 = vadd.f32 0.0, %v1051
      %v1053 = vpop.f32.mrf.mxu0
      %v1054 = vadd.f32 0.0, %v1053
      %1055 = vmatmul.bf16.gmra.mxu0 %v754
      %v1056 = vpop.f32.mrf.mxu0
      %v1057 = vadd.f32 0.0, %v1056
      %v1058 = vpop.f32.mrf.mxu0
      %v1059 = vadd.f32 0.0, %v1058
      %1060 = vmatmul.bf16.gmra.mxu0 %v757
      %v1061 = vpop.f32.mrf.mxu0
      %v1062 = vadd.f32 0.0, %v1061
      %v1063 = vpop.f32.mrf.mxu0
      %v1064 = vadd.f32 0.0, %v1063
      %1065 = vmatmul.bf16.gmra.mxu0 %v760
      %v1066 = vpop.f32.mrf.mxu0
      %v1067 = vadd.f32 0.0, %v1066
      %v1068 = vpop.f32.mrf.mxu0
      %v1069 = vadd.f32 0.0, %v1068
      %1070 = vmatmul.bf16.gmra.mxu0 %v1022
      %v1071 = vpop.f32.mrf.mxu0
      %v1072 = vadd.f32 0.0, %v1071
      %v1073 = vpop.f32.mrf.mxu0
      %v1074 = vadd.f32 0.0, %v1073
      %1075 = vdwg.mxu0
      %v1076 = vadd.f32 %v992, %v1037
      %v1077 = vadd.f32 %v993, %v1039
      %v1078 = vadd.f32 %v994, %v1042
      %v1079 = vadd.f32 %v995, %v1044
      %v1080 = vadd.f32 %v996, %v1047
      %v1081 = vadd.f32 %v997, %v1049
      %v1082 = vadd.f32 %v998, %v1052
      %v1083 = vadd.f32 %v999, %v1054
      %v1084 = vadd.f32 %v1000, %v1057
      %v1085 = vadd.f32 %v1001, %v1059
      %v1086 = vadd.f32 %v1002, %v1062
      %v1087 = vadd.f32 %v1003, %v1064
      %v1088 = vadd.f32 %v1004, %v1067
      %v1089 = vadd.f32 %v1005, %v1069
      %v1090 = vadd.f32 %v1006, %v1072
      %v1091 = vadd.f32 %v1007, %v1074
      %s1092 = scalar_lea.vmem %s1, 12
      %v1093 = vld [vmem:[%s1092] sm:$0x3]
      %v1096 = vunpack.c.l.b16 %v226
      %v1097 = vunpack.c.l.b16 %v227
      %v1098 = vpack.c.b16 %v1097, %v1096
      %v1100 = vsel %vm451, %v1098, 0
      %v1103 = vsel %vm476, %v1093, 0
      %1105 = vmatpush.bf16.msra.mxu0 0
      %1106 = vmatpush.bf16.msra.mxu0 0
      %1107 = vmatpush.bf16.msra.mxu0 0
      %1108 = vmatpush.bf16.msra.mxu0 0
      %1109 = vmatpush.bf16.msra.mxu0 0
      %1110 = vmatpush.bf16.msra.mxu0 0
      %1111 = vmatpush.bf16.msra.mxu0 0
      %1112 = vmatpush.bf16.msra.mxu0 %v1103
      %1113 = vmatmul.bf16.gmra.mxu0 %v576
      %v1114 = vpop.f32.mrf.mxu0
      %v1115 = vadd.f32 0.0, %v1114
      %v1116 = vpop.f32.mrf.mxu0
      %v1117 = vadd.f32 0.0, %v1116
      %1118 = vmatmul.bf16.gmra.mxu0 %v579
      %v1119 = vpop.f32.mrf.mxu0
      %v1120 = vadd.f32 0.0, %v1119
      %v1121 = vpop.f32.mrf.mxu0
      %v1122 = vadd.f32 0.0, %v1121
      %1123 = vmatmul.bf16.gmra.mxu0 %v582
      %v1124 = vpop.f32.mrf.mxu0
      %v1125 = vadd.f32 0.0, %v1124
      %v1126 = vpop.f32.mrf.mxu0
      %v1127 = vadd.f32 0.0, %v1126
      %1128 = vmatmul.bf16.gmra.mxu0 %v585
      %v1129 = vpop.f32.mrf.mxu0
      %v1130 = vadd.f32 0.0, %v1129
      %v1131 = vpop.f32.mrf.mxu0
      %v1132 = vadd.f32 0.0, %v1131
      %1133 = vmatmul.bf16.gmra.mxu0 %v588
      %v1134 = vpop.f32.mrf.mxu0
      %v1135 = vadd.f32 0.0, %v1134
      %v1136 = vpop.f32.mrf.mxu0
      %v1137 = vadd.f32 0.0, %v1136
      %1138 = vmatmul.bf16.gmra.mxu0 %v591
      %v1139 = vpop.f32.mrf.mxu0
      %v1140 = vadd.f32 0.0, %v1139
      %v1141 = vpop.f32.mrf.mxu0
      %v1142 = vadd.f32 0.0, %v1141
      %1143 = vmatmul.bf16.gmra.mxu0 %v838
      %v1144 = vpop.f32.mrf.mxu0
      %v1145 = vadd.f32 0.0, %v1144
      %v1146 = vpop.f32.mrf.mxu0
      %v1147 = vadd.f32 0.0, %v1146
      %1148 = vmatmul.bf16.gmra.mxu0 %v1100
      %v1149 = vpop.f32.mrf.mxu0
      %v1150 = vadd.f32 0.0, %v1149
      %v1151 = vpop.f32.mrf.mxu0
      %v1152 = vadd.f32 0.0, %v1151
      %1153 = vdwg.mxu0
      %v1154 = vadd.f32 %v1076, %v1115
      %v1155 = vadd.f32 %v1077, %v1117
      %v1156 = vadd.f32 %v1078, %v1120
      %v1157 = vadd.f32 %v1079, %v1122
      %v1158 = vadd.f32 %v1080, %v1125
      %v1159 = vadd.f32 %v1081, %v1127
      %v1160 = vadd.f32 %v1082, %v1130
      %v1161 = vadd.f32 %v1083, %v1132
      %v1162 = vadd.f32 %v1084, %v1135
      %v1163 = vadd.f32 %v1085, %v1137
      %v1164 = vadd.f32 %v1086, %v1140
      %v1165 = vadd.f32 %v1087, %v1142
      %v1166 = vadd.f32 %v1088, %v1145
      %v1167 = vadd.f32 %v1089, %v1147
      %v1168 = vadd.f32 %v1090, %v1150
      %v1169 = vadd.f32 %v1091, %v1152
      %v1171 = vshrl.u32 %v226, 16
      %v1173 = vrot.slane %v1171, 4
      %v1174 = vshll.u32 %v226, 16
      %v1176 = vrot.slane %v1174, 5
      %v1177 = vor.u32 %v1173, %v1176
      %v1178 = vrot.slane %v1177, 4
      %v1180 = vshll.u32 %v227, 16
      %v1182 = vrot.slane %v1180, 5
      %v1183 = vsel %vm232, %v1178, %v1182
      %v1184 = vshrl.u32 %v227, 16
      %v1186 = vrot.slane %v1184, 4
      %v1187 = vor.u32 %v1186, %v1182
      %v1188 = vrot.slane %v1187, 4
      %v1190 = vshll.u32 %v228, 16
      %v1192 = vrot.slane %v1190, 5
      %v1193 = vsel %vm232, %v1188, %v1192
      %s1194 = scalar_lea.vmem %s1, 14
      %v1195 = vld [vmem:[%s1194] sm:$0x3]
      %v1196 = vunpack.c.l.b16 %v1183
      %v1197 = vunpack.c.l.b16 %v1193
      %v1198 = vpack.c.b16 %v1197, %v1196
      %v1200 = vsel %vm451, %v1198, 0
      %v1203 = vsel %vm476, %v1195, 0
      %1205 = vmatpush.bf16.msra.mxu0 0
      %1206 = vmatpush.bf16.msra.mxu0 0
      %1207 = vmatpush.bf16.msra.mxu0 0
      %1208 = vmatpush.bf16.msra.mxu0 0
      %1209 = vmatpush.bf16.msra.mxu0 0
      %1210 = vmatpush.bf16.msra.mxu0 0
      %1211 = vmatpush.bf16.msra.mxu0 0
      %1212 = vmatpush.bf16.msra.mxu0 %v1203
      %1213 = vmatmul.bf16.gmra.mxu0 %v459
      %v1214 = vpop.f32.mrf.mxu0
      %v1215 = vadd.f32 0.0, %v1214
      %v1216 = vpop.f32.mrf.mxu0
      %v1217 = vadd.f32 0.0, %v1216
      %1218 = vmatmul.bf16.gmra.mxu0 %v462
      %v1219 = vpop.f32.mrf.mxu0
      %v1220 = vadd.f32 0.0, %v1219
      %v1221 = vpop.f32.mrf.mxu0
      %v1222 = vadd.f32 0.0, %v1221
      %1223 = vmatmul.bf16.gmra.mxu0 %v465
      %v1224 = vpop.f32.mrf.mxu0
      %v1225 = vadd.f32 0.0, %v1224
      %v1226 = vpop.f32.mrf.mxu0
      %v1227 = vadd.f32 0.0, %v1226
      %1228 = vmatmul.bf16.gmra.mxu0 %v468
      %v1229 = vpop.f32.mrf.mxu0
      %v1230 = vadd.f32 0.0, %v1229
      %v1231 = vpop.f32.mrf.mxu0
      %v1232 = vadd.f32 0.0, %v1231
      %1233 = vmatmul.bf16.gmra.mxu0 %v471
      %v1234 = vpop.f32.mrf.mxu0
      %v1235 = vadd.f32 0.0, %v1234
      %v1236 = vpop.f32.mrf.mxu0
      %v1237 = vadd.f32 0.0, %v1236
      %1238 = vmatmul.bf16.gmra.mxu0 %v474
      %v1239 = vpop.f32.mrf.mxu0
      %v1240 = vadd.f32 0.0, %v1239
      %v1241 = vpop.f32.mrf.mxu0
      %v1242 = vadd.f32 0.0, %v1241
      %1243 = vmatmul.bf16.gmra.mxu0 %v938
      %v1244 = vpop.f32.mrf.mxu0
      %v1245 = vadd.f32 0.0, %v1244
      %v1246 = vpop.f32.mrf.mxu0
      %v1247 = vadd.f32 0.0, %v1246
      %1248 = vmatmul.bf16.gmra.mxu0 %v1200
      %v1249 = vpop.f32.mrf.mxu0
      %v1250 = vadd.f32 0.0, %v1249
      %v1251 = vpop.f32.mrf.mxu0
      %v1252 = vadd.f32 0.0, %v1251
      %1253 = vdwg.mxu0
      %v1254 = vadd.f32 %v1154, %v1215
      %v1255 = vadd.f32 %v1155, %v1217
      %v1256 = vadd.f32 %v1156, %v1220
      %v1257 = vadd.f32 %v1157, %v1222
      %v1258 = vadd.f32 %v1158, %v1225
      %v1259 = vadd.f32 %v1159, %v1227
      %v1260 = vadd.f32 %v1160, %v1230
      %v1261 = vadd.f32 %v1161, %v1232
      %v1262 = vadd.f32 %v1162, %v1235
      %v1263 = vadd.f32 %v1163, %v1237
      %v1264 = vadd.f32 %v1164, %v1240
      %v1265 = vadd.f32 %v1165, %v1242
      %v1266 = vadd.f32 %v1166, %v1245
      %v1267 = vadd.f32 %v1167, %v1247
      %v1268 = vadd.f32 %v1168, %v1250
      %v1269 = vadd.f32 %v1169, %v1252
      %v1271 = vrot.slane %v226, 5
      %v1272 = vrot.slane %v1271, 4
      %v1273 = vrot.slane %v227, 5
      %v1274 = vsel %vm655, %v1272, %v1273
      %v1275 = vrot.slane %v1273, 4
      %v1276 = vrot.slane %v228, 5
      %v1277 = vsel %vm655, %v1275, %v1276
      %s1278 = scalar_lea.vmem %s1, 16
      %v1279 = vld [vmem:[%s1278] sm:$0x3]
      %v1280 = vunpack.c.l.b16 %v1274
      %v1281 = vunpack.c.l.b16 %v1277
      %v1282 = vpack.c.b16 %v1281, %v1280
      %v1284 = vsel %vm451, %v1282, 0
      %v1287 = vsel %vm476, %v1279, 0
      %1289 = vmatpush.bf16.msra.mxu0 0
      %1290 = vmatpush.bf16.msra.mxu0 0
      %1291 = vmatpush.bf16.msra.mxu0 0
      %1292 = vmatpush.bf16.msra.mxu0 0
      %1293 = vmatpush.bf16.msra.mxu0 0
      %1294 = vmatpush.bf16.msra.mxu0 0
      %1295 = vmatpush.bf16.msra.mxu0 0
      %1296 = vmatpush.bf16.msra.mxu0 %v1287
      %1297 = vmatmul.bf16.gmra.mxu0 %v745
      %v1298 = vpop.f32.mrf.mxu0
      %v1299 = vadd.f32 0.0, %v1298
      %v1300 = vpop.f32.mrf.mxu0
      %v1301 = vadd.f32 0.0, %v1300
      %1302 = vmatmul.bf16.gmra.mxu0 %v748
      %v1303 = vpop.f32.mrf.mxu0
      %v1304 = vadd.f32 0.0, %v1303
      %v1305 = vpop.f32.mrf.mxu0
      %v1306 = vadd.f32 0.0, %v1305
      %1307 = vmatmul.bf16.gmra.mxu0 %v751
      %v1308 = vpop.f32.mrf.mxu0
      %v1309 = vadd.f32 0.0, %v1308
      %v1310 = vpop.f32.mrf.mxu0
      %v1311 = vadd.f32 0.0, %v1310
      %1312 = vmatmul.bf16.gmra.mxu0 %v754
      %v1313 = vpop.f32.mrf.mxu0
      %v1314 = vadd.f32 0.0, %v1313
      %v1315 = vpop.f32.mrf.mxu0
      %v1316 = vadd.f32 0.0, %v1315
      %1317 = vmatmul.bf16.gmra.mxu0 %v757
      %v1318 = vpop.f32.mrf.mxu0
      %v1319 = vadd.f32 0.0, %v1318
      %v1320 = vpop.f32.mrf.mxu0
      %v1321 = vadd.f32 0.0, %v1320
      %1322 = vmatmul.bf16.gmra.mxu0 %v760
      %v1323 = vpop.f32.mrf.mxu0
      %v1324 = vadd.f32 0.0, %v1323
      %v1325 = vpop.f32.mrf.mxu0
      %v1326 = vadd.f32 0.0, %v1325
      %1327 = vmatmul.bf16.gmra.mxu0 %v1022
      %v1328 = vpop.f32.mrf.mxu0
      %v1329 = vadd.f32 0.0, %v1328
      %v1330 = vpop.f32.mrf.mxu0
      %v1331 = vadd.f32 0.0, %v1330
      %1332 = vmatmul.bf16.gmra.mxu0 %v1284
      %v1333 = vpop.f32.mrf.mxu0
      %v1334 = vadd.f32 0.0, %v1333
      %v1335 = vpop.f32.mrf.mxu0
      %v1336 = vadd.f32 0.0, %v1335
      %1337 = vdwg.mxu0
      %v1338 = vadd.f32 %v1254, %v1299
      %v1339 = vadd.f32 %v1255, %v1301
      %v1340 = vadd.f32 %v1256, %v1304
      %v1341 = vadd.f32 %v1257, %v1306
      %v1342 = vadd.f32 %v1258, %v1309
      %v1343 = vadd.f32 %v1259, %v1311
      %v1344 = vadd.f32 %v1260, %v1314
      %v1345 = vadd.f32 %v1261, %v1316
      %v1346 = vadd.f32 %v1262, %v1319
      %v1347 = vadd.f32 %v1263, %v1321
      %v1348 = vadd.f32 %v1264, %v1324
      %v1349 = vadd.f32 %v1265, %v1326
      %v1350 = vadd.f32 %v1266, %v1329
      %v1351 = vadd.f32 %v1267, %v1331
      %v1352 = vadd.f32 %v1268, %v1334
      %v1353 = vadd.f32 %v1269, %v1336
      %v1354 = vld [vmem:[%s2] sm:$0x1]
      %v1355 = vperm.slane %v1354, 0
      %v1356 = vsub.f32 %v1338, %v1355
      %v1357 = vsub.f32 %v1339, %v1355
      %v1358 = vsub.f32 %v1340, %v1355
      %v1359 = vsub.f32 %v1341, %v1355
      %v1360 = vsub.f32 %v1342, %v1355
      %v1361 = vsub.f32 %v1343, %v1355
      %v1362 = vsub.f32 %v1344, %v1355
      %v1363 = vsub.f32 %v1345, %v1355
      %v1364 = vsub.f32 %v1346, %v1355
      %v1365 = vsub.f32 %v1347, %v1355
      %v1366 = vsub.f32 %v1348, %v1355
      %v1367 = vsub.f32 %v1349, %v1355
      %v1368 = vsub.f32 %v1350, %v1355
      %v1369 = vsub.f32 %v1351, %v1355
      %v1370 = vsub.f32 %v1352, %v1355
      %v1371 = vsub.f32 %v1353, %v1355
      %v1372 = vld [vmem:[%s2 + $0x1] sm:$0x1]
      %v1373 = vperm.slane %v1372, 0
      %v1374 = vmul.f32 %v1356, %v1373
      %v1375 = vmul.f32 %v1357, %v1373
      %v1376 = vmul.f32 %v1358, %v1373
      %v1377 = vmul.f32 %v1359, %v1373
      %v1378 = vmul.f32 %v1360, %v1373
      %v1379 = vmul.f32 %v1361, %v1373
      %v1380 = vmul.f32 %v1362, %v1373
      %v1381 = vmul.f32 %v1363, %v1373
      %v1382 = vmul.f32 %v1364, %v1373
      %v1383 = vmul.f32 %v1365, %v1373
      %v1384 = vmul.f32 %v1366, %v1373
      %v1385 = vmul.f32 %v1367, %v1373
      %v1386 = vmul.f32 %v1368, %v1373
      %v1387 = vmul.f32 %v1369, %v1373
      %v1388 = vmul.f32 %v1370, %v1373
      %v1389 = vmul.f32 %v1371, %v1373
      %v1390 = vmax.f32 %v1374, 0.0
      %v1391 = vmax.f32 %v1375, 0.0
      %v1392 = vmax.f32 %v1376, 0.0
      %v1393 = vmax.f32 %v1377, 0.0
      %v1394 = vmax.f32 %v1378, 0.0
      %v1395 = vmax.f32 %v1379, 0.0
      %v1396 = vmax.f32 %v1380, 0.0
      %v1397 = vmax.f32 %v1381, 0.0
      %v1398 = vmax.f32 %v1382, 0.0
      %v1399 = vmax.f32 %v1383, 0.0
      %v1400 = vmax.f32 %v1384, 0.0
      %v1401 = vmax.f32 %v1385, 0.0
      %v1402 = vmax.f32 %v1386, 0.0
      %v1403 = vmax.f32 %v1387, 0.0
      %v1404 = vmax.f32 %v1388, 0.0
      %v1405 = vmax.f32 %v1389, 0.0
      %1406 = vst [vmem:[%s192] sm:$0xff] %v1390
      %1407 = vst [vmem:[%s192 + $0x8] sm:$0xff] %v1391
      %1408 = vst [vmem:[%s192 + $0x10] sm:$0xff] %v1392
      %1409 = vst [vmem:[%s192 + $0x18] sm:$0xff] %v1393
      %1410 = vst [vmem:[%s192 + $0x20] sm:$0xff] %v1394
      %1411 = vst [vmem:[%s192 + $0x28] sm:$0xff] %v1395
      %1412 = vst [vmem:[%s192 + $0x30] sm:$0xff] %v1396
      %1413 = vst [vmem:[%s192 + $0x38] sm:$0xff] %v1397
      %1414 = vst [vmem:[%s192 + $0x40] sm:$0xff] %v1398
      %1415 = vst [vmem:[%s192 + $0x48] sm:$0xff] %v1399
      %1416 = vst [vmem:[%s192 + $0x50] sm:$0xff] %v1400
      %1417 = vst [vmem:[%s192 + $0x58] sm:$0xff] %v1401
      %1418 = vst [vmem:[%s192 + $0x60] sm:$0xff] %v1402
      %1419 = vst [vmem:[%s192 + $0x68] sm:$0xff] %v1403
      %1420 = vst [vmem:[%s192 + $0x70] sm:$0xff] %v1404
      %1421 = vst [vmem:[%s192 + $0x78] sm:$0xff] %v1405
      %s1422 = smul.u32 16, %s19
      %p1423 = scmp.lt.s32.totalorder %s18, 1
      %s1424 = scalar_select %p1423, %s18, 1
      %p1425 = scmp.lt.s32.totalorder %s1422, 31
      %s1426 = scalar_select %p1425, %s1422, 31
      %s1427 = smul.addr %s1424, 32
      %s1428 = sadd.s32 %s1426, %s1427
      %s1429 = smul.addr %s1428, 8
      %s1430 = scalar_lea.vmem %s3, %s1429
      // Predicated region
      $region33: #{basic_conv_block.3} parent=31 // pred_check
        %p1431 = pneg %p114
      $region34: #{basic_conv_block.3} parent=31 // pred_check_branch
        %1433 = sbr.rel (%p1431) target = $region36
      $region35: #{basic_conv_block.3} parent=31 // pred_region
        %s1434 = smul.u32 16, %s19
      $region36: #{basic_conv_block.3} parent=31 // pred_fallthru
        _
    $region32: #{basic_conv_block.3} parent=5 // pred_fallthru
      _
    %p1435 = scmp.le.s32.totalorder 2, %s9
    // Predicated region
    $region37: #{basic_conv_block.3} parent=5 // pred_check
      %p1436 = pneg %p1435
    $region38: #{basic_conv_block.3} parent=5 // pred_check_branch
      %1438 = sbr.rel (%p1436) target = $region40
    $region39: #{basic_conv_block.3} parent=5 // pred_region
      %s1439 = ssub.s32 %s9, 2
      // Predicated region
      $region41: #{basic_conv_block.3} parent=39 // pred_check
        %p1440 = pneg %p120
      $region42: #{basic_conv_block.3} parent=39 // pred_check_branch
        %1442 = sbr.rel (%p1440) target = $region44
      $region43: #{basic_conv_block.3} parent=39 // pred_region
        %s1443 = smul.u32 16, %s21
        %p1444 = scmp.lt.s32.totalorder %s20, 1
        %s1445 = scalar_select %p1444, %s20, 1
        %p1446 = scmp.lt.s32.totalorder %s1443, 31
        %s1447 = scalar_select %p1446, %s1443, 31
        %s1448 = smul.addr %s1445, 32
        %s1449 = sadd.s32 %s1447, %s1448
        %s1450 = smul.addr %s1449, 8
        %s1451 = scalar_lea.vmem %s3, %s1450
      $region44: #{basic_conv_block.3} parent=39 // pred_fallthru
        _
    $region40: #{basic_conv_block.3} parent=5 // pred_fallthru
      _
  $region6: #{basic_conv_block.3} parent=0 // loop_footer
    %s13 = sadd.s32 1, %s9
  $region7: #{basic_conv_block.3} parent=0 // loop_footer_branch
    %8 = sbr.rel target = $region3
  $region8: #{basic_conv_block.3} parent=0 // loop_exit
    _

</llo_original>
